<compile_context>
chip_gen: v7x
topology: tpu7x:2x2x1
jax: 0.10.0
libtpu: 0.0.40
codegen_flags: <defaults>
</compile_context>

<pallas_src>
import jax
import jax.numpy as jnp
from jax.experimental import pallas as pl
from jax.experimental.pallas import tpu as pltpu

LN_EPS = 1e-5


def _emohead_kernel(nte_ref, ntp_ref, nfe_ref, nfp_ref,      # SMEM prefetch [nb] int32
                    enc_ref, pred_ref,                        # VMEM [tb,tt,E], [tb,tu,P]
                    alen_ref, tlen_ref,                       # VMEM [tb,1] int32
                    inv_a_ref, inv_t_ref,                     # VMEM [tb,1] f32
                    w_e_ref, w_p_ref, bias_ref,               # VMEM [E,C],[P,C],[1,C] f32
                    out_ref,                                  # VMEM [tb,C] f32
                    acc_e_ref, acc_p_ref):                    # scratch f32 [tb,E],[tb,P]
    b = pl.program_id(0)
    s = pl.program_id(1)
    ns = pl.num_programs(1)

    tb, tt, E = enc_ref.shape
    _, tu, P = pred_ref.shape
    D = E + P

    @pl.when(s == 0)
    def _init():
        acc_e_ref[...] = jnp.zeros_like(acc_e_ref)
        acc_p_ref[...] = jnp.zeros_like(acc_p_ref)

    n_full_e = nfe_ref[b]
    n_tile_e = nte_ref[b]
    n_full_p = nfp_ref[b]
    n_tile_p = ntp_ref[b]

    # ---- enc: interior tiles (valid for every row) -> unmasked sum ---------
    @pl.when(s < n_full_e)
    def _acc_enc_full():
        acc_e_ref[...] += jnp.sum(enc_ref[...].astype(jnp.float32), axis=1)

    # ---- enc: single ragged boundary tile -> select-mask (NaN-safe) --------
    @pl.when(jnp.logical_and(s >= n_full_e, s < n_tile_e))
    def _acc_enc_edge():
        t_idx = s * tt + jax.lax.broadcasted_iota(jnp.int32, (tb, tt, E), 1)
        valid = t_idx < alen_ref[...][:, :, None]
        acc_e_ref[...] += jnp.sum(
            jnp.where(valid, enc_ref[...].astype(jnp.float32), 0.0), axis=1)

    # ---- pred: interior tiles -> unmasked sum -------------------------------
    @pl.when(s < n_full_p)
    def _acc_pred_full():
        acc_p_ref[...] += jnp.sum(pred_ref[...].astype(jnp.float32), axis=1)

    # ---- pred: boundary tile -> select-mask ---------------------------------
    @pl.when(jnp.logical_and(s >= n_full_p, s < n_tile_p))
    def _acc_pred_edge():
        u_idx = s * tu + jax.lax.broadcasted_iota(jnp.int32, (tb, tu, P), 1)
        valid = u_idx < tlen_ref[...][:, :, None]
        acc_p_ref[...] += jnp.sum(
            jnp.where(valid, pred_ref[...].astype(jnp.float32), 0.0), axis=1)

    # ---- finalize: mean-pool (reciprocal mul), LayerNorm, folded head -------
    @pl.when(s == ns - 1)
    def _finalize():
        ep = acc_e_ref[...] * inv_a_ref[...]                  # [tb, E]
        pp = acc_p_ref[...] * inv_t_ref[...]                  # [tb, P]
        mean = (jnp.sum(ep, axis=-1, keepdims=True) +
                jnp.sum(pp, axis=-1, keepdims=True)) * (1.0 / D)
        de = ep - mean
        dp = pp - mean
        var = (jnp.sum(de * de, axis=-1, keepdims=True) +
               jnp.sum(dp * dp, axis=-1, keepdims=True)) * (1.0 / D)
        inv = jax.lax.rsqrt(var + LN_EPS)
        out = (jnp.dot(de * inv, w_e_ref[...], preferred_element_type=jnp.float32) +
               jnp.dot(dp * inv, w_p_ref[...], preferred_element_type=jnp.float32) +
               bias_ref[...])
        out_ref[...] = out.astype(out_ref.dtype)


def _vmem_cap_bytes():
    """Generation-keyed scoped-VMEM budget (v7x has 64 MiB/TC; v4/v5e/v6e 128 MiB)."""
    try:
        kind = jax.devices()[0].device_kind.lower()
    except Exception:
        kind = ""
    if "v7" in kind:
        return 48 * 2 ** 20
    if any(k in kind for k in ("v4", "v5", "v6")):
        return 96 * 2 ** 20
    return 48 * 2 ** 20


def _pick_time_tile(n, cap):
    """Largest time tile <= cap that avoids host-side padding when possible.
    Returns either n itself (single tile), a multiple-of-8 divisor of n, or
    `cap` (fallback: caller zero-pads the tail)."""
    cap = max(8, (cap // 8) * 8)
    if n <= cap:
        return n
    best = 0
    for cand in range(cap, 7, -8):
        if n % cand == 0:
            best = cand
            break
    if best >= max(64, cap // 4):
        return best
    return cap  # no decent divisor: pad to a multiple of cap


def emohead_forward(enc_out, audio_length, pred_out, text_length,
                    gamma, beta, W, b, *, tb=None, tt=None, tu=None,
                    vmem_cap=None):
    """enc_out: [B,T,E] (any float dtype), pred_out: [B,U,P], gamma/beta: [E+P],
    W: [E+P, C], b: [C]. Returns [B, C] float32 (mode='pool')."""
    B, T, E = enc_out.shape
    B2, U, P = pred_out.shape
    assert B2 == B
    D, C = W.shape
    assert D == E + P

    ie = jnp.dtype(enc_out.dtype).itemsize
    ip = jnp.dtype(pred_out.dtype).itemsize
    cap = _vmem_cap_bytes() if vmem_cap is None else int(vmem_cap)

    # --- batch tile: multiple of 8 (out-block rule) or the full batch --------
    if tb is None:
        if B <= 8:
            tb = B
        elif B % 8 == 0:
            tb = 8                       # nb = B/8 >= 2 -> megacore sharding
        elif 256 * B * (E * ie + P * ip) <= cap // 2:
            tb = B                       # whole batch; avoids padding enc/pred
        else:
            tb = 8                       # rare fallback: pad batch to mult of 8
    Bp = B if B % tb == 0 else B + (-B) % tb

    # --- time tiles: budget-aware, divisor-of-T/U preferred (no host pad) ----
    if tt is None:
        cap_tt = min(2048, max(8, (cap // 6) // max(1, tb * E * ie)))
        tt = _pick_time_tile(T, cap_tt)
    if tu is None:
        cap_tu = min(2048, max(8, (cap // 12) // max(1, tb * P * ip)))
        tu = _pick_time_tile(U, cap_tu)
    Tp = T if T % tt == 0 else T + (-T) % tt
    Up = U if U % tu == 0 else U + (-U) % tu

    # --- fold LayerNorm affine into the head on the host ---------------------
    W32 = W.astype(jnp.float32)
    W_fold = gamma.astype(jnp.float32)[:, None] * W32                    # [D, C]
    b_fold = beta.astype(jnp.float32) @ W32 + b.astype(jnp.float32)      # [C]
    w_e, w_p = W_fold[:E], W_fold[E:]
    bias = b_fold.reshape(1, C)

    # --- pad only when tile choice could not avoid it (zero-pad => mask-safe) -
    enc, pred = enc_out, pred_out
    if Tp != T:
        enc = jnp.pad(enc, ((0, 0), (0, Tp - T), (0, 0)))
    if Up != U:
        pred = jnp.pad(pred, ((0, 0), (0, Up - U), (0, 0)))
    if Bp != B:
        enc = jnp.pad(enc, ((0, Bp - B), (0, 0), (0, 0)))
        pred = jnp.pad(pred, ((0, Bp - B), (0, 0), (0, 0)))

    alen = audio_length.astype(jnp.int32).reshape(B)
    tlen = text_length.astype(jnp.int32).reshape(B)
    if Bp != B:  # padded rows: length 1 (their zero data pools to 0, sliced off)
        one = jnp.ones((Bp - B,), jnp.int32)
        alen = jnp.concatenate([alen, one])
        tlen = jnp.concatenate([tlen, one])
    alen2 = alen.reshape(Bp, 1)
    tlen2 = tlen.reshape(Bp, 1)
    # precomputed reciprocals; clamp zero lengths so len==0 rows give 0, not NaN
    inv_a = 1.0 / jnp.maximum(alen2, 1).astype(jnp.float32)
    inv_t = 1.0 / jnp.maximum(tlen2, 1).astype(jnp.float32)

    nb, nTt, nUt = Bp // tb, Tp // tt, Up // tu
    ns = max(nTt, nUt)

    # per-batch-tile seq-tile counts (scalar prefetch):
    #   nte/ntp : tiles containing any valid data  -> skip fetch/compute beyond
    #   nfe/nfp : tiles fully valid for every row  -> unmasked fast path
    a_t = alen.reshape(nb, tb)
    t_t = tlen.reshape(nb, tb)
    nte = jnp.clip((jnp.max(a_t, axis=1) + tt - 1) // tt, 1, nTt).astype(jnp.int32)
    ntp = jnp.clip((jnp.max(t_t, axis=1) + tu - 1) // tu, 1, nUt).astype(jnp.int32)
    nfe = jnp.clip(jnp.min(a_t, axis=1) // tt, 0, nTt).astype(jnp.int32)
    nfp = jnp.clip(jnp.min(t_t, axis=1) // tu, 0, nUt).astype(jnp.int32)

    def enc_map(bi, si, nte_r, ntp_r, nfe_r, nfp_r):
        # Clamp past-the-end steps to the last valid tile: repeated block index
        # -> Pallas dedups the DMA; the pl.when guards skip the compute.
        return (bi, jnp.minimum(si, nte_r[bi] - 1), 0)

    def pred_map(bi, si, nte_r, ntp_r, nfe_r, nfp_r):
        return (bi, jnp.minimum(si, ntp_r[bi] - 1), 0)

    def b_only(bi, si, nte_r, ntp_r, nfe_r, nfp_r):
        return (bi, 0)

    def fixed2(bi, si, nte_r, ntp_r, nfe_r, nfp_r):
        return (0, 0)

    out = pl.pallas_call(
        _emohead_kernel,
        out_shape=jax.ShapeDtypeStruct((Bp, C), jnp.float32),
        grid_spec=pltpu.PrefetchScalarGridSpec(
            num_scalar_prefetch=4,
            grid=(nb, ns),
            in_specs=[
                pl.BlockSpec((tb, tt, E), enc_map),
                pl.BlockSpec((tb, tu, P), pred_map),
                pl.BlockSpec((tb, 1), b_only),
                pl.BlockSpec((tb, 1), b_only),
                pl.BlockSpec((tb, 1), b_only),
                pl.BlockSpec((tb, 1), b_only),
                pl.BlockSpec((E, C), fixed2),
                pl.BlockSpec((P, C), fixed2),
                pl.BlockSpec((1, C), fixed2),
            ],
            out_specs=pl.BlockSpec((tb, C), b_only),
            scratch_shapes=[pltpu.VMEM((tb, E), jnp.float32),
                            pltpu.VMEM((tb, P), jnp.float32)],
        ),
        compiler_params=pltpu.CompilerParams(
            dimension_semantics=("parallel", "arbitrary"),
            vmem_limit_bytes=int(cap),
        ),
    )(nte, ntp, nfe, nfp, enc, pred, alen2, tlen2, inv_a, inv_t, w_e, w_p, bias)
    return out[:B]


def ref_forward(enc, alen, pred, tlen, gamma, beta, W, b):
    """Pure-JAX reference mirroring the PyTorch forward (mode='pool')."""
    B, T, E = enc.shape
    _, U, P = pred.shape
    am = (jnp.arange(T)[None, :] < alen[:, None])[:, :, None]
    ep = jnp.sum(jnp.where(am, enc.astype(jnp.float32), 0.0), axis=1) \
        / alen[:, None].astype(jnp.float32)
    tm = (jnp.arange(U)[None, :] < tlen[:, None])[:, :, None]
    pp = jnp.sum(jnp.where(tm, pred.astype(jnp.float32), 0.0), axis=1) \
        / tlen[:, None].astype(jnp.float32)
    x = jnp.concatenate([ep, pp], axis=-1)
    mu = x.mean(-1, keepdims=True)
    var = ((x - mu) ** 2).mean(-1, keepdims=True)
    xn = (x - mu) * jax.lax.rsqrt(var + LN_EPS) * gamma + beta
    return xn @ W + b


if __name__ == "__main__":
    # Small but grid-exercising shapes.
    B, T, E = 8, 128, 128     # enc_out: [B, T, E]
    U, P = 64, 64             # pred_out: [B, U, P]
    C = 4                     # num_classes

    key = jax.random.PRNGKey(0)
    k_enc, k_pred, k_w, k_b = jax.random.split(key, 4)

    enc_out = jax.random.normal(k_enc, (B, T, E), dtype=jnp.float32)
    pred_out = jax.random.normal(k_pred, (B, U, P), dtype=jnp.float32)
    # Crafted lengths so (with tt=tu=32) the kernel exercises: unmasked interior
    # tiles (n_full >= 1), masked boundary tiles, and fully-skipped trailing tiles.
    audio_length = jnp.array([128, 127, 96, 65, 64, 50, 40, 33], dtype=jnp.int32)
    text_length = jnp.array([64, 63, 48, 34, 33, 40, 60, 35], dtype=jnp.int32)

    D = E + P
    gamma = 1.0 + 0.1 * jax.random.normal(jax.random.PRNGKey(1), (D,), dtype=jnp.float32)
    beta = 0.1 * jax.random.normal(jax.random.PRNGKey(2), (D,), dtype=jnp.float32)
    W = jax.random.normal(k_w, (D, C), dtype=jnp.float32) * (1.0 / jnp.sqrt(D))
    b = jax.random.normal(k_b, (C,), dtype=jnp.float32) * 0.01

    # f32 activations, multi-tile grid (4 enc tiles, 2 pred tiles per batch tile)
    out = emohead_forward(enc_out, audio_length, pred_out, text_length,
                          gamma, beta, W, b, tt=32, tu=32)
    out = jax.block_until_ready(out)
    ref = ref_forward(enc_out, audio_length, pred_out, text_length,
                      gamma, beta, W, b)
    assert out.shape == (B, C)
    assert jnp.allclose(out, ref, atol=1e-4, rtol=1e-4), (out, ref)

    # bf16 activations: native-dtype HBM traffic, f32 accumulation in-kernel.
    enc_bf = enc_out.astype(jnp.bfloat16)
    pred_bf = pred_out.astype(jnp.bfloat16)
    out_bf = emohead_forward(enc_bf, audio_length, pred_bf, text_length,
                             gamma, beta, W, b, tt=32, tu=32)
    out_bf = jax.block_until_ready(out_bf)
    ref_bf = ref_forward(enc_bf.astype(jnp.float32), audio_length,
                         pred_bf.astype(jnp.float32), text_length,
                         gamma, beta, W, b)
    assert jnp.allclose(out_bf, ref_bf, atol=5e-2, rtol=5e-2), (out_bf, ref_bf)

    # Auto tile selection, small odd batch (tb == B path, single-tile seq dims).
    B2 = 4
    enc2 = jax.random.normal(jax.random.PRNGKey(3), (B2, T, E), dtype=jnp.float32)
    pred2 = jax.random.normal(jax.random.PRNGKey(4), (B2, U, P), dtype=jnp.float32)
    al2 = jnp.array([5, 17, 128, 1], dtype=jnp.int32)
    tl2 = jnp.array([64, 3, 9, 1], dtype=jnp.int32)
    out2 = emohead_forward(enc2, al2, pred2, tl2, gamma, beta, W, b)
    out2 = jax.block_until_ready(out2)
    ref2 = ref_forward(enc2, al2, pred2, tl2, gamma, beta, W, b)
    assert jnp.allclose(out2, ref2, atol=1e-4, rtol=1e-4), (out2, ref2)

    print("KERNEL_OK")
</pallas_src>

<mosaic_0001>
module attributes {stable_mosaic.version = 11 : i64} {
  func.func @_emohead_kernel(%arg0: i32, %arg1: i32, %arg2: memref<1xi32, #tpu.memory_space<smem>>, %arg3: memref<1xi32, #tpu.memory_space<smem>>, %arg4: memref<1xi32, #tpu.memory_space<smem>>, %arg5: memref<1xi32, #tpu.memory_space<smem>>, %arg6: memref<8x32x128xf32, #tpu.memory_space<vmem>>, %arg7: memref<8x32x64xf32, #tpu.memory_space<vmem>>, %arg8: memref<8x1xi32, #tpu.memory_space<vmem>>, %arg9: memref<8x1xi32, #tpu.memory_space<vmem>>, %arg10: memref<8x1xf32, #tpu.memory_space<vmem>>, %arg11: memref<8x1xf32, #tpu.memory_space<vmem>>, %arg12: memref<128x4xf32, #tpu.memory_space<vmem>>, %arg13: memref<64x4xf32, #tpu.memory_space<vmem>>, %arg14: memref<1x4xf32, #tpu.memory_space<vmem>>, %arg15: memref<8x4xf32, #tpu.memory_space<vmem>>, %arg16: memref<8x128xf32, #tpu.memory_space<vmem>>, %arg17: memref<8x64xf32, #tpu.memory_space<vmem>>) attributes {dimension_semantics = [#tpu.dimension_semantics<parallel>, #tpu.dimension_semantics<arbitrary>], iteration_bounds = array<i64: 1, 4>, scalar_prefetch = 4 : i64, scratch_operands = 2 : i64, tpu.core_type = #tpu.core_type<tc>, window_params = [{transform_indices = @transform_0, window_bounds = array<i64: 8, 32, 128>}, {transform_indices = @transform_1, window_bounds = array<i64: 8, 32, 64>}, {transform_indices = @transform_2, window_bounds = array<i64: 8, 1>}, {transform_indices = @transform_3, window_bounds = array<i64: 8, 1>}, {transform_indices = @transform_4, window_bounds = array<i64: 8, 1>}, {transform_indices = @transform_5, window_bounds = array<i64: 8, 1>}, {pipeline_mode = #tpu.pipeline_mode<synchronous>, transform_indices = @transform_6, window_bounds = array<i64: 128, 4>}, {pipeline_mode = #tpu.pipeline_mode<synchronous>, transform_indices = @transform_7, window_bounds = array<i64: 64, 4>}, {pipeline_mode = #tpu.pipeline_mode<synchronous>, transform_indices = @transform_8, window_bounds = array<i64: 1, 4>}, {transform_indices = @transform_9, window_bounds = array<i64: 8, 4>}]} {
    %c0_i32 = arith.constant 0 : i32
    %0 = arith.cmpi eq, %arg1, %c0_i32 : i32
    %1 = arith.extui %0 : i1 to i32
    %c0_i32_0 = arith.constant 0 : i32
    %2 = arith.cmpi ne, %1, %c0_i32_0 : i32
    scf.if %2 {
      %cst = arith.constant 0.000000e+00 : f32
      %30 = vector.broadcast %cst : f32 to vector<8x128xf32>
      %c0 = arith.constant 0 : index
      %c0_6 = arith.constant 0 : index
      %31 = vector.load %arg16[%c0, %c0_6] : memref<8x128xf32, #tpu.memory_space<vmem>>, vector<8x128xf32>
      tpu.vector_store %arg16[%c0, %c0_6], %30 {strides = array<i32>} : memref<8x128xf32, #tpu.memory_space<vmem>>, vector<8x128xf32>,
      %cst_7 = arith.constant 0.000000e+00 : f32
      %32 = vector.broadcast %cst_7 : f32 to vector<8x64xf32>
      %c0_8 = arith.constant 0 : index
      %c0_9 = arith.constant 0 : index
      %33 = vector.load %arg17[%c0_8, %c0_9] : memref<8x64xf32, #tpu.memory_space<vmem>>, vector<8x64xf32>
      tpu.vector_store %arg17[%c0_8, %c0_9], %32 {strides = array<i32>} : memref<8x64xf32, #tpu.memory_space<vmem>>, vector<8x64xf32>,
    } else {
    }
    %3 = arith.index_cast %arg0 : i32 to index
    %4 = memref.load %arg4[%3] : memref<1xi32, #tpu.memory_space<smem>>
    %5 = arith.index_cast %arg0 : i32 to index
    %6 = memref.load %arg2[%5] : memref<1xi32, #tpu.memory_space<smem>>
    %7 = arith.index_cast %arg0 : i32 to index
    %8 = memref.load %arg5[%7] : memref<1xi32, #tpu.memory_space<smem>>
    %9 = arith.index_cast %arg0 : i32 to index
    %10 = memref.load %arg3[%9] : memref<1xi32, #tpu.memory_space<smem>>
    %11 = arith.cmpi slt, %arg1, %4 : i32
    %12 = arith.extui %11 : i1 to i32
    %c0_i32_1 = arith.constant 0 : i32
    %13 = arith.cmpi ne, %12, %c0_i32_1 : i32
    scf.if %13 {
      %c0 = arith.constant 0 : index
      %c0_6 = arith.constant 0 : index
      %30 = vector.load %arg16[%c0, %c0_6] : memref<8x128xf32, #tpu.memory_space<vmem>>, vector<8x128xf32>
      %c0_7 = arith.constant 0 : index
      %c0_8 = arith.constant 0 : index
      %c0_9 = arith.constant 0 : index
      %31 = vector.load %arg6[%c0_7, %c0_8, %c0_9] : memref<8x32x128xf32, #tpu.memory_space<vmem>>, vector<8x32x128xf32>
      %cst = arith.constant dense<0.000000e+00> : vector<8x128xf32>
      %32 = vector.multi_reduction <add>, %31, %cst [1] : vector<8x32x128xf32> to vector<8x128xf32>
      %33 = arith.addf %30, %32 : vector<8x128xf32>
      %c0_10 = arith.constant 0 : index
      %c0_11 = arith.constant 0 : index
      %34 = vector.load %arg16[%c0_10, %c0_11] : memref<8x128xf32, #tpu.memory_space<vmem>>, vector<8x128xf32>
      tpu.vector_store %arg16[%c0_10, %c0_11], %33 {strides = array<i32>} : memref<8x128xf32, #tpu.memory_space<vmem>>, vector<8x128xf32>,
    } else {
    }
    %14 = arith.cmpi sge, %arg1, %4 : i32
    %15 = arith.cmpi slt, %arg1, %6 : i32
    %16 = arith.andi %14, %15 : i1
    %17 = arith.extui %16 : i1 to i32
    %c0_i32_2 = arith.constant 0 : i32
    %18 = arith.cmpi ne, %17, %c0_i32_2 : i32
    scf.if %18 {
      %c32_i32 = arith.constant 32 : i32
      %30 = arith.muli %arg1, %c32_i32 : i32
      %31 = tpu.iota {dimensions = array<i32: 1>} : vector<8x32x128xi32>
      %32 = vector.broadcast %30 : i32 to vector<8x32x128xi32>
      %33 = arith.addi %32, %31 : vector<8x32x128xi32>
      %c0 = arith.constant 0 : index
      %c0_6 = arith.constant 0 : index
      %34 = vector.load %arg8[%c0, %c0_6] : memref<8x1xi32, #tpu.memory_space<vmem>>, vector<8x1xi32>
      %35 = vector.shape_cast %34 : vector<8x1xi32> to vector<8x1x1xi32>
      %36 = vector.broadcast %35 : vector<8x1x1xi32> to vector<8x32x128xi32>
      %37 = arith.cmpi slt, %33, %36 : vector<8x32x128xi32>
      %c0_7 = arith.constant 0 : index
      %c0_8 = arith.constant 0 : index
      %38 = vector.load %arg16[%c0_7, %c0_8] : memref<8x128xf32, #tpu.memory_space<vmem>>, vector<8x128xf32>
      %c0_9 = arith.constant 0 : index
      %c0_10 = arith.constant 0 : index
      %c0_11 = arith.constant 0 : index
      %39 = vector.load %arg6[%c0_9, %c0_10, %c0_11] : memref<8x32x128xf32, #tpu.memory_space<vmem>>, vector<8x32x128xf32>
      %cst = arith.constant 0.000000e+00 : f32
      %40 = vector.broadcast %cst : f32 to vector<8x32x128xf32>
      %41 = arith.select %37, %39, %40 : vector<8x32x128xi1>, vector<8x32x128xf32>
      %cst_12 = arith.constant dense<0.000000e+00> : vector<8x128xf32>
      %42 = vector.multi_reduction <add>, %41, %cst_12 [1] : vector<8x32x128xf32> to vector<8x128xf32>
      %43 = arith.addf %38, %42 : vector<8x128xf32>
      %c0_13 = arith.constant 0 : index
      %c0_14 = arith.constant 0 : index
      %44 = vector.load %arg16[%c0_13, %c0_14] : memref<8x128xf32, #tpu.memory_space<vmem>>, vector<8x128xf32>
      tpu.vector_store %arg16[%c0_13, %c0_14], %43 {strides = array<i32>} : memref<8x128xf32, #tpu.memory_space<vmem>>, vector<8x128xf32>,
    } else {
    }
    %19 = arith.cmpi slt, %arg1, %8 : i32
    %20 = arith.extui %19 : i1 to i32
    %c0_i32_3 = arith.constant 0 : i32
    %21 = arith.cmpi ne, %20, %c0_i32_3 : i32
    scf.if %21 {
      %c0 = arith.constant 0 : index
      %c0_6 = arith.constant 0 : index
      %30 = vector.load %arg17[%c0, %c0_6] : memref<8x64xf32, #tpu.memory_space<vmem>>, vector<8x64xf32>
      %c0_7 = arith.constant 0 : index
      %c0_8 = arith.constant 0 : index
      %c0_9 = arith.constant 0 : index
      %31 = vector.load %arg7[%c0_7, %c0_8, %c0_9] : memref<8x32x64xf32, #tpu.memory_space<vmem>>, vector<8x32x64xf32>
      %cst = arith.constant dense<0.000000e+00> : vector<8x64xf32>
      %32 = vector.multi_reduction <add>, %31, %cst [1] : vector<8x32x64xf32> to vector<8x64xf32>
      %33 = arith.addf %30, %32 : vector<8x64xf32>
      %c0_10 = arith.constant 0 : index
      %c0_11 = arith.constant 0 : index
      %34 = vector.load %arg17[%c0_10, %c0_11] : memref<8x64xf32, #tpu.memory_space<vmem>>, vector<8x64xf32>
      tpu.vector_store %arg17[%c0_10, %c0_11], %33 {strides = array<i32>} : memref<8x64xf32, #tpu.memory_space<vmem>>, vector<8x64xf32>,
    } else {
    }
    %22 = arith.cmpi sge, %arg1, %8 : i32
    %23 = arith.cmpi slt, %arg1, %10 : i32
    %24 = arith.andi %22, %23 : i1
    %25 = arith.extui %24 : i1 to i32
    %c0_i32_4 = arith.constant 0 : i32
    %26 = arith.cmpi ne, %25, %c0_i32_4 : i32
    scf.if %26 {
      %c32_i32 = arith.constant 32 : i32
      %30 = arith.muli %arg1, %c32_i32 : i32
      %31 = tpu.iota {dimensions = array<i32: 1>} : vector<8x32x64xi32>
      %32 = vector.broadcast %30 : i32 to vector<8x32x64xi32>
      %33 = arith.addi %32, %31 : vector<8x32x64xi32>
      %c0 = arith.constant 0 : index
      %c0_6 = arith.constant 0 : index
      %34 = vector.load %arg9[%c0, %c0_6] : memref<8x1xi32, #tpu.memory_space<vmem>>, vector<8x1xi32>
      %35 = vector.shape_cast %34 : vector<8x1xi32> to vector<8x1x1xi32>
      %36 = vector.broadcast %35 : vector<8x1x1xi32> to vector<8x32x64xi32>
      %37 = arith.cmpi slt, %33, %36 : vector<8x32x64xi32>
      %c0_7 = arith.constant 0 : index
      %c0_8 = arith.constant 0 : index
      %38 = vector.load %arg17[%c0_7, %c0_8] : memref<8x64xf32, #tpu.memory_space<vmem>>, vector<8x64xf32>
      %c0_9 = arith.constant 0 : index
      %c0_10 = arith.constant 0 : index
      %c0_11 = arith.constant 0 : index
      %39 = vector.load %arg7[%c0_9, %c0_10, %c0_11] : memref<8x32x64xf32, #tpu.memory_space<vmem>>, vector<8x32x64xf32>
      %cst = arith.constant 0.000000e+00 : f32
      %40 = vector.broadcast %cst : f32 to vector<8x32x64xf32>
      %41 = arith.select %37, %39, %40 : vector<8x32x64xi1>, vector<8x32x64xf32>
      %cst_12 = arith.constant dense<0.000000e+00> : vector<8x64xf32>
      %42 = vector.multi_reduction <add>, %41, %cst_12 [1] : vector<8x32x64xf32> to vector<8x64xf32>
      %43 = arith.addf %38, %42 : vector<8x64xf32>
      %c0_13 = arith.constant 0 : index
      %c0_14 = arith.constant 0 : index
      %44 = vector.load %arg17[%c0_13, %c0_14] : memref<8x64xf32, #tpu.memory_space<vmem>>, vector<8x64xf32>
      tpu.vector_store %arg17[%c0_13, %c0_14], %43 {strides = array<i32>} : memref<8x64xf32, #tpu.memory_space<vmem>>, vector<8x64xf32>,
    } else {
    }
    %c3_i32 = arith.constant 3 : i32
    %27 = arith.cmpi eq, %arg1, %c3_i32 : i32
    %28 = arith.extui %27 : i1 to i32
    %c0_i32_5 = arith.constant 0 : i32
    %29 = arith.cmpi ne, %28, %c0_i32_5 : i32
    scf.if %29 {
      %c0 = arith.constant 0 : index
      %c0_6 = arith.constant 0 : index
      %30 = vector.load %arg16[%c0, %c0_6] : memref<8x128xf32, #tpu.memory_space<vmem>>, vector<8x128xf32>
      %c0_7 = arith.constant 0 : index
      %c0_8 = arith.constant 0 : index
      %31 = vector.load %arg10[%c0_7, %c0_8] : memref<8x1xf32, #tpu.memory_space<vmem>>, vector<8x1xf32>
      %32 = vector.broadcast %31 : vector<8x1xf32> to vector<8x128xf32>
      %33 = arith.mulf %30, %32 : vector<8x128xf32>
      %c0_9 = arith.constant 0 : index
      %c0_10 = arith.constant 0 : index
      %34 = vector.load %arg17[%c0_9, %c0_10] : memref<8x64xf32, #tpu.memory_space<vmem>>, vector<8x64xf32>
      %c0_11 = arith.constant 0 : index
      %c0_12 = arith.constant 0 : index
      %35 = vector.load %arg11[%c0_11, %c0_12] : memref<8x1xf32, #tpu.memory_space<vmem>>, vector<8x1xf32>
      %36 = vector.broadcast %35 : vector<8x1xf32> to vector<8x64xf32>
      %37 = arith.mulf %34, %36 : vector<8x64xf32>
      %cst = arith.constant dense<0.000000e+00> : vector<8xf32>
      %38 = vector.multi_reduction <add>, %33, %cst [1] : vector<8x128xf32> to vector<8xf32>
      %39 = vector.shape_cast %38 : vector<8xf32> to vector<8x1xf32>
      %cst_13 = arith.constant dense<0.000000e+00> : vector<8xf32>
      %40 = vector.multi_reduction <add>, %37, %cst_13 [1] : vector<8x64xf32> to vector<8xf32>
      %41 = vector.shape_cast %40 : vector<8xf32> to vector<8x1xf32>
      %42 = arith.addf %39, %41 : vector<8x1xf32>
      %cst_14 = arith.constant 0.00520833349 : f32
      %43 = vector.broadcast %cst_14 : f32 to vector<8x1xf32>
      %44 = arith.mulf %42, %43 : vector<8x1xf32>
      %45 = vector.broadcast %44 : vector<8x1xf32> to vector<8x128xf32>
      %46 = arith.subf %33, %45 : vector<8x128xf32>
      %47 = vector.broadcast %44 : vector<8x1xf32> to vector<8x64xf32>
      %48 = arith.subf %37, %47 : vector<8x64xf32>
      %49 = arith.mulf %46, %46 : vector<8x128xf32>
      %cst_15 = arith.constant dense<0.000000e+00> : vector<8xf32>
      %50 = vector.multi_reduction <add>, %49, %cst_15 [1] : vector<8x128xf32> to vector<8xf32>
      %51 = vector.shape_cast %50 : vector<8xf32> to vector<8x1xf32>
      %52 = arith.mulf %48, %48 : vector<8x64xf32>
      %cst_16 = arith.constant dense<0.000000e+00> : vector<8xf32>
      %53 = vector.multi_reduction <add>, %52, %cst_16 [1] : vector<8x64xf32> to vector<8xf32>
      %54 = vector.shape_cast %53 : vector<8xf32> to vector<8x1xf32>
      %55 = arith.addf %51, %54 : vector<8x1xf32>
      %cst_17 = arith.constant 0.00520833349 : f32
      %56 = vector.broadcast %cst_17 : f32 to vector<8x1xf32>
      %57 = arith.mulf %55, %56 : vector<8x1xf32>
      %cst_18 = arith.constant 9.99999974E-6 : f32
      %58 = vector.broadcast %cst_18 : f32 to vector<8x1xf32>
      %59 = arith.addf %57, %58 : vector<8x1xf32>
      %60 = math.rsqrt %59 : vector<8x1xf32>
      %61 = vector.broadcast %60 : vector<8x1xf32> to vector<8x128xf32>
      %62 = arith.mulf %46, %61 : vector<8x128xf32>
      %c0_19 = arith.constant 0 : index
      %c0_20 = arith.constant 0 : index
      %63 = vector.load %arg12[%c0_19, %c0_20] : memref<128x4xf32, #tpu.memory_space<vmem>>, vector<128x4xf32>
      %cst_21 = arith.constant dense<0.000000e+00> : vector<8x4xf32>
      %64 = tpu.matmul %62, %63, %cst_21 {dimension_numbers = #tpu.dot_dimension_numbers<[1], [0], [0], [1], [0, 0, 1, 1], [], []>} : vector<8x128xf32>, vector<128x4xf32>, vector<8x4xf32> -> vector<8x4xf32>
      %65 = vector.broadcast %60 : vector<8x1xf32> to vector<8x64xf32>
      %66 = arith.mulf %48, %65 : vector<8x64xf32>
      %c0_22 = arith.constant 0 : index
      %c0_23 = arith.constant 0 : index
      %67 = vector.load %arg13[%c0_22, %c0_23] : memref<64x4xf32, #tpu.memory_space<vmem>>, vector<64x4xf32>
      %cst_24 = arith.constant dense<0.000000e+00> : vector<8x4xf32>
      %68 = tpu.matmul %66, %67, %cst_24 {dimension_numbers = #tpu.dot_dimension_numbers<[1], [0], [0], [1], [0, 0, 1, 1], [], []>} : vector<8x64xf32>, vector<64x4xf32>, vector<8x4xf32> -> vector<8x4xf32>
      %69 = arith.addf %64, %68 : vector<8x4xf32>
      %c0_25 = arith.constant 0 : index
      %c0_26 = arith.constant 0 : index
      %70 = vector.load %arg14[%c0_25, %c0_26] : memref<1x4xf32, #tpu.memory_space<vmem>>, vector<1x4xf32>
      %71 = vector.broadcast %70 : vector<1x4xf32> to vector<8x4xf32>
      %72 = arith.addf %69, %71 : vector<8x4xf32>
      %c0_27 = arith.constant 0 : index
      %c0_28 = arith.constant 0 : index
      %73 = vector.load %arg15[%c0_27, %c0_28] : memref<8x4xf32, #tpu.memory_space<vmem>>, vector<8x4xf32>
      tpu.vector_store %arg15[%c0_27, %c0_28], %72 {strides = array<i32>} : memref<8x4xf32, #tpu.memory_space<vmem>>, vector<8x4xf32>,
    } else {
    }
    return
  }
  func.func @transform_0(%arg0: i32, %arg1: i32, %arg2: memref<1xi32, #tpu.memory_space<smem>>, %arg3: memref<1xi32, #tpu.memory_space<smem>>, %arg4: memref<1xi32, #tpu.memory_space<smem>>, %arg5: memref<1xi32, #tpu.memory_space<smem>>) -> (i32, i32, i32) {
    %0 = arith.index_cast %arg0 : i32 to index
    %1 = memref.load %arg2[%0] : memref<1xi32, #tpu.memory_space<smem>>
    %c1_i32 = arith.constant 1 : i32
    %2 = arith.subi %1, %c1_i32 : i32
    %3 = arith.minsi %arg1, %2 : i32
    %c0_i32 = arith.constant 0 : i32
    %c0_i32_0 = arith.constant 0 : i32
    return %arg0, %3, %c0_i32 : i32, i32, i32
  }
  func.func @transform_1(%arg0: i32, %arg1: i32, %arg2: memref<1xi32, #tpu.memory_space<smem>>, %arg3: memref<1xi32, #tpu.memory_space<smem>>, %arg4: memref<1xi32, #tpu.memory_space<smem>>, %arg5: memref<1xi32, #tpu.memory_space<smem>>) -> (i32, i32, i32) {
    %0 = arith.index_cast %arg0 : i32 to index
    %1 = memref.load %arg3[%0] : memref<1xi32, #tpu.memory_space<smem>>
    %c1_i32 = arith.constant 1 : i32
    %2 = arith.subi %1, %c1_i32 : i32
    %3 = arith.minsi %arg1, %2 : i32
    %c0_i32 = arith.constant 0 : i32
    %c0_i32_0 = arith.constant 0 : i32
    return %arg0, %3, %c0_i32 : i32, i32, i32
  }
  func.func @transform_2(%arg0: i32, %arg1: i32, %arg2: memref<1xi32, #tpu.memory_space<smem>>, %arg3: memref<1xi32, #tpu.memory_space<smem>>, %arg4: memref<1xi32, #tpu.memory_space<smem>>, %arg5: memref<1xi32, #tpu.memory_space<smem>>) -> (i32, i32) {
    %c0_i32 = arith.constant 0 : i32
    %c0_i32_0 = arith.constant 0 : i32
    return %arg0, %c0_i32 : i32, i32
  }
  func.func @transform_3(%arg0: i32, %arg1: i32, %arg2: memref<1xi32, #tpu.memory_space<smem>>, %arg3: memref<1xi32, #tpu.memory_space<smem>>, %arg4: memref<1xi32, #tpu.memory_space<smem>>, %arg5: memref<1xi32, #tpu.memory_space<smem>>) -> (i32, i32) {
    %c0_i32 = arith.constant 0 : i32
    %c0_i32_0 = arith.constant 0 : i32
    return %arg0, %c0_i32 : i32, i32
  }
  func.func @transform_4(%arg0: i32, %arg1: i32, %arg2: memref<1xi32, #tpu.memory_space<smem>>, %arg3: memref<1xi32, #tpu.memory_space<smem>>, %arg4: memref<1xi32, #tpu.memory_space<smem>>, %arg5: memref<1xi32, #tpu.memory_space<smem>>) -> (i32, i32) {
    %c0_i32 = arith.constant 0 : i32
    %c0_i32_0 = arith.constant 0 : i32
    return %arg0, %c0_i32 : i32, i32
  }
  func.func @transform_5(%arg0: i32, %arg1: i32, %arg2: memref<1xi32, #tpu.memory_space<smem>>, %arg3: memref<1xi32, #tpu.memory_space<smem>>, %arg4: memref<1xi32, #tpu.memory_space<smem>>, %arg5: memref<1xi32, #tpu.memory_space<smem>>) -> (i32, i32) {
    %c0_i32 = arith.constant 0 : i32
    %c0_i32_0 = arith.constant 0 : i32
    return %arg0, %c0_i32 : i32, i32
  }
  func.func @transform_6(%arg0: i32, %arg1: i32, %arg2: memref<1xi32, #tpu.memory_space<smem>>, %arg3: memref<1xi32, #tpu.memory_space<smem>>, %arg4: memref<1xi32, #tpu.memory_space<smem>>, %arg5: memref<1xi32, #tpu.memory_space<smem>>) -> (i32, i32) {
    %c0_i32 = arith.constant 0 : i32
    %c0_i32_0 = arith.constant 0 : i32
    %c0_i32_1 = arith.constant 0 : i32
    return %c0_i32, %c0_i32_0 : i32, i32
  }
  func.func @transform_7(%arg0: i32, %arg1: i32, %arg2: memref<1xi32, #tpu.memory_space<smem>>, %arg3: memref<1xi32, #tpu.memory_space<smem>>, %arg4: memref<1xi32, #tpu.memory_space<smem>>, %arg5: memref<1xi32, #tpu.memory_space<smem>>) -> (i32, i32) {
    %c0_i32 = arith.constant 0 : i32
    %c0_i32_0 = arith.constant 0 : i32
    %c0_i32_1 = arith.constant 0 : i32
    return %c0_i32, %c0_i32_0 : i32, i32
  }
  func.func @transform_8(%arg0: i32, %arg1: i32, %arg2: memref<1xi32, #tpu.memory_space<smem>>, %arg3: memref<1xi32, #tpu.memory_space<smem>>, %arg4: memref<1xi32, #tpu.memory_space<smem>>, %arg5: memref<1xi32, #tpu.memory_space<smem>>) -> (i32, i32) {
    %c0_i32 = arith.constant 0 : i32
    %c0_i32_0 = arith.constant 0 : i32
    %c0_i32_1 = arith.constant 0 : i32
    return %c0_i32, %c0_i32_0 : i32, i32
  }
  func.func @transform_9(%arg0: i32, %arg1: i32, %arg2: memref<1xi32, #tpu.memory_space<smem>>, %arg3: memref<1xi32, #tpu.memory_space<smem>>, %arg4: memref<1xi32, #tpu.memory_space<smem>>, %arg5: memref<1xi32, #tpu.memory_space<smem>>) -> (i32, i32) {
    %c0_i32 = arith.constant 0 : i32
    %c0_i32_0 = arith.constant 0 : i32
    return %arg0, %c0_i32 : i32, i32
  }
}

</mosaic_0001>

<llo_original>
// kernel: tpu_custom_call.1
$region0: #{tpu_custom_call.1}
  #allocation0 [shape = 'u32[]', space=smem, size = 0x4, offset = 0x4, fixed_abs, tag = 'smem constant byte address 0x4 - core index']
  #allocation1 [shape = 'u32[144,128]{1,0:T(1,128)}', space=vmem, size = 0x12000, scoped, tag = 'internal scratch']
  #allocation2 [shape = 'f32[8,128]{1,0:T(8,128)}', space=vmem, size = 0x1000, scoped, tag = 'scratch operand']
  #allocation3 [shape = 'f32[8,64]{1,0:T(8,128)}', space=vmem, size = 0x1000, scoped, tag = 'scratch operand']
  #allocation4 [shape = 's32[1]{0}', space=sflag, size = 0x4, scoped, tag = 'scoped memory for tpu_custom_call.1']
  #allocation5 [shape = 's32[1]{0:T(128)S(6)}', space=smem, size = 0x200, scoped, tag = 'prefetched SMEM operand 0']
  #allocation6 [shape = 's32[1]{0:T(128)S(6)}', space=smem, size = 0x200, scoped, tag = 'prefetched SMEM operand 1']
  #allocation7 [shape = 's32[1]{0:T(128)S(6)}', space=smem, size = 0x200, scoped, tag = 'prefetched SMEM operand 2']
  #allocation8 [shape = 's32[1]{0:T(128)S(6)}', space=smem, size = 0x200, scoped, tag = 'prefetched SMEM operand 3']
  #allocation13 [shape = 's32[]', space=sflag, size = 0x4, offset = 0, fixed_abs, tag = 'sflag constant byte address 0x0 - dummy sync flag']
  #allocation15 [shape = 's32[]', space=sflag, size = 0x4, offset = 0, fixed_abs, tag = 'sflag constant byte address 0x0 - dummy sync flag']
  %s0 = inlined_call_operand.<no memory space> [shape: s32[1], index: 0, kind: input, shape index: {}]
  %s1 = inlined_call_operand.<no memory space> [shape: s32[1], index: 1, kind: input, shape index: {}]
  %s2 = inlined_call_operand.<no memory space> [shape: s32[1], index: 2, kind: input, shape index: {}]
  %s3 = inlined_call_operand.<no memory space> [shape: s32[1], index: 3, kind: input, shape index: {}]
  %s4 = inlined_call_operand.hbm [shape: f32[8,128,128], index: 4, kind: input, shape index: {}]
  %s5 = inlined_call_operand.hbm [shape: f32[8,64,64], index: 5, kind: input, shape index: {}]
  %s6 = inlined_call_operand.vmem [shape: s32[8,1], index: 6, kind: input, shape index: {}]
  %s7 = inlined_call_operand.vmem [shape: s32[8,1], index: 7, kind: input, shape index: {}]
  %s8 = inlined_call_operand.vmem [shape: f32[8,1], index: 8, kind: input, shape index: {}]
  %s9 = inlined_call_operand.vmem [shape: f32[8,1], index: 9, kind: input, shape index: {}]
  %s10 = inlined_call_operand.vmem [shape: f32[128,4], index: 10, kind: input, shape index: {}]
  %s11 = inlined_call_operand.vmem [shape: f32[64,4], index: 11, kind: input, shape index: {}]
  %s12 = inlined_call_operand.vmem [shape: f32[1,4], index: 12, kind: input, shape index: {}]
  %s13 = inlined_call_operand.vmem [shape: f32[8,4], index: 13, kind: output, shape index: {}]
  %s14 = sld [smem:[#allocation0]]
  $region101: #{tpu_custom_call.1} parent=0
    _
  %s16 = ssub.s32 1, %s14
  %s17 = scalar_select 0, %s16, %s14
  %18 = sst [smem:[#allocation5]] %s0
  %19 = sst [smem:[#allocation6]] %s1
  %20 = sst [smem:[#allocation7]] %s2
  %21 = sst [smem:[#allocation8]] %s3
  $region1: #{tpu_custom_call.1} parent=0
    #allocation9 [shape = 'u8[262144]{0}', space=vmem, size = 0x40000, scoped, tag = 'input window, operand 4']
    #allocation10 [shape = 's32[2]{0}', space=sflag, size = 0x8, scoped, tag = 'scoped memory for tpu_custom_call.1']
    #allocation11 [shape = 'u8[262144]{0}', space=vmem, size = 0x40000, scoped, tag = 'input window, operand 5']
    #allocation12 [shape = 's32[2]{0}', space=sflag, size = 0x8, scoped, tag = 'scoped memory for tpu_custom_call.1']
    %22 = vsyncpa [#allocation10], 0
    %s23 = scalar_lea.sflag [#allocation10], 1
    %24 = vsyncpa %s23, 0
    %25 = vsyncpa [#allocation12], 0
    %s26 = scalar_lea.sflag [#allocation12], 1
    %27 = vsyncpa %s26, 0
    loop: start=0, step=1, limit=6
    $region2: #{tpu_custom_call.1} parent=1 // loop_pre_header
      _
    $region3: #{tpu_custom_call.1} parent=1 // loop_header
      %s29 = sphi 0, %s33
      %p30 = scmp.ge.s32.totalorder %s29, 6
      %s36 = sphi 0, %s48
      %s37 = sphi 0, %s44
      %s38 = sphi 0, %s36
      %s39 = sphi 0, %s37
      %s40 = sphi 0, %s38
      %s41 = sphi 0, %s39
      %s61 = sphi 0, %s63
      %s64 = sphi 0, %s61
      %s65 = sphi 0, %s64
      %s81 = sphi 0, %s65
      %s97 = sphi 0, %s99
      %s100 = sphi 0, %s97
      %s101 = sphi 0, %s100
      %s117 = sphi 0, %s101
      %s123 = sphi 0, %s125
      %s126 = sphi 0, %s123
      %s127 = sphi 0, %s126
      %s143 = sphi 0, %s127
      %s149 = sphi 0, %s151
      %s152 = sphi 0, %s149
      %s153 = sphi 0, %s152
      %s169 = sphi 0, %s153
      %s175 = sphi 0, %s177
      %s178 = sphi 0, %s175
      %s179 = sphi 0, %s178
      %s195 = sphi 0, %s179
      %s201 = sphi 0, %s203
      %s204 = sphi 0, %s201
      %s205 = sphi 0, %s204
      %s221 = sphi 0, %s205
      %s225 = sphi 0, %s225
      %s227 = sphi 0, %s225
      %s228 = sphi 0, %s227
      %s242 = sphi 0, %s228
      %s246 = sphi 0, %s246
      %s248 = sphi 0, %s246
      %s249 = sphi 0, %s248
      %s263 = sphi 0, %s249
      %s267 = sphi 0, %s267
      %s269 = sphi 0, %s267
      %s270 = sphi 0, %s269
      %s284 = sphi 0, %s270
      %s290 = sphi 0, %s292
      %s293 = sphi 0, %s290
      %s294 = sphi 0, %s293
      %s310 = sphi 0, %s294
    $region4: #{tpu_custom_call.1} parent=1 // loop_header_branch
      %32 = sbr.rel (%p30) target = $region8
    $region5: #{tpu_custom_call.1} parent=1 // loop_body
      %s34 = ssub.s32 %s29, 1
      %s35 = ssub.s32 %s29, 2
      %s42 = sadd.s32 1, %s37
      %p43 = scmp.ge.s32.totalorder %s42, 4
      %s44 = scalar_select %p43, 0, %s42
      %s45 = sadd.s32 1, %s36
      %s46 = scalar_select %p43, %s45, %s36
      %p47 = scmp.ge.s32.totalorder %s46, 1
      %s48 = scalar_select %p47, 0, %s46
      %s49 = sld [smem:[#allocation5 + %s36]]
      %s50 = ssub.s32 %s49, 1
      %p51 = scmp.lt.s32.totalorder %s37, %s50
      %s52 = scalar_select %p51, %s37, %s50
      %s53 = sld [smem:[#allocation5 + %s48]]
      %s54 = ssub.s32 %s53, 1
      %p55 = scmp.lt.s32.totalorder %s44, %s54
      %s56 = scalar_select %p55, %s44, %s54
      %s57 = ssub.s32 %s36, %s48
      %s58 = ssub.s32 %s52, %s56
      %s59 = sor.u32 %s57, %s58
      %p60 = scmp.eq.s32.totalorder %s59, 0
      %s62 = sadd.s32 %s61, 1
      %s63 = scalar_select %p60, %s61, %s62
      %p66 = pneg %p60
      %p67 = scmp.eq.s32.totalorder %s29, 3
      %p68 = por %p66, %p67
      %p69 = scmp.ne.s32.totalorder %s61, %s64
      %p70 = scmp.eq.s32.totalorder %s29, 0
      %p71 = por %p69, %p70
      %p72 = scmp.ne.s32.totalorder %s61, %s64
      %p73 = scmp.eq.s32.totalorder %s34, 3
      %p74 = por %p72, %p73
      %p75 = scmp.ne.s32.totalorder %s64, %s65
      %p76 = scmp.eq.s32.totalorder %s34, 0
      %p77 = por %p75, %p76
      %p78 = scmp.ne.s32.totalorder %s64, %s65
      %p79 = scmp.eq.s32.totalorder %s35, 3
      %p80 = por %p78, %p79
      %p82 = scmp.ne.s32.totalorder %s65, %s81
      %p83 = scmp.eq.s32.totalorder %s35, 0
      %p84 = por %p82, %p83
      %s85 = sld [smem:[#allocation6 + %s36]]
      %s86 = ssub.s32 %s85, 1
      %p87 = scmp.lt.s32.totalorder %s37, %s86
      %s88 = scalar_select %p87, %s37, %s86
      %s89 = sld [smem:[#allocation6 + %s48]]
      %s90 = ssub.s32 %s89, 1
      %p91 = scmp.lt.s32.totalorder %s44, %s90
      %s92 = scalar_select %p91, %s44, %s90
      %s93 = ssub.s32 %s36, %s48
      %s94 = ssub.s32 %s88, %s92
      %s95 = sor.u32 %s93, %s94
      %p96 = scmp.eq.s32.totalorder %s95, 0
      %s98 = sadd.s32 %s97, 1
      %s99 = scalar_select %p96, %s97, %s98
      %p102 = pneg %p96
      %p103 = scmp.eq.s32.totalorder %s29, 3
      %p104 = por %p102, %p103
      %p105 = scmp.ne.s32.totalorder %s97, %s100
      %p106 = scmp.eq.s32.totalorder %s29, 0
      %p107 = por %p105, %p106
      %p108 = scmp.ne.s32.totalorder %s97, %s100
      %p109 = scmp.eq.s32.totalorder %s34, 3
      %p110 = por %p108, %p109
      %p111 = scmp.ne.s32.totalorder %s100, %s101
      %p112 = scmp.eq.s32.totalorder %s34, 0
      %p113 = por %p111, %p112
      %p114 = scmp.ne.s32.totalorder %s100, %s101
      %p115 = scmp.eq.s32.totalorder %s35, 3
      %p116 = por %p114, %p115
      %p118 = scmp.ne.s32.totalorder %s101, %s117
      %p119 = scmp.eq.s32.totalorder %s35, 0
      %p120 = por %p118, %p119
      %s121 = ssub.s32 %s36, %s48
      %p122 = scmp.eq.s32.totalorder %s121, 0
      %s124 = sadd.s32 %s123, 1
      %s125 = scalar_select %p122, %s123, %s124
      %p128 = pneg %p122
      %p129 = scmp.eq.s32.totalorder %s29, 3
      %p130 = por %p128, %p129
      %p131 = scmp.ne.s32.totalorder %s123, %s126
      %p132 = scmp.eq.s32.totalorder %s29, 0
      %p133 = por %p131, %p132
      %p134 = scmp.ne.s32.totalorder %s123, %s126
      %p135 = scmp.eq.s32.totalorder %s34, 3
      %p136 = por %p134, %p135
      %p137 = scmp.ne.s32.totalorder %s126, %s127
      %p138 = scmp.eq.s32.totalorder %s34, 0
      %p139 = por %p137, %p138
      %p140 = scmp.ne.s32.totalorder %s126, %s127
      %p141 = scmp.eq.s32.totalorder %s35, 3
      %p142 = por %p140, %p141
      %p144 = scmp.ne.s32.totalorder %s127, %s143
      %p145 = scmp.eq.s32.totalorder %s35, 0
      %p146 = por %p144, %p145
      %s147 = ssub.s32 %s36, %s48
      %p148 = scmp.eq.s32.totalorder %s147, 0
      %s150 = sadd.s32 %s149, 1
      %s151 = scalar_select %p148, %s149, %s150
      %p154 = pneg %p148
      %p155 = scmp.eq.s32.totalorder %s29, 3
      %p156 = por %p154, %p155
      %p157 = scmp.ne.s32.totalorder %s149, %s152
      %p158 = scmp.eq.s32.totalorder %s29, 0
      %p159 = por %p157, %p158
      %p160 = scmp.ne.s32.totalorder %s149, %s152
      %p161 = scmp.eq.s32.totalorder %s34, 3
      %p162 = por %p160, %p161
      %p163 = scmp.ne.s32.totalorder %s152, %s153
      %p164 = scmp.eq.s32.totalorder %s34, 0
      %p165 = por %p163, %p164
      %p166 = scmp.ne.s32.totalorder %s152, %s153
      %p167 = scmp.eq.s32.totalorder %s35, 3
      %p168 = por %p166, %p167
      %p170 = scmp.ne.s32.totalorder %s153, %s169
      %p171 = scmp.eq.s32.totalorder %s35, 0
      %p172 = por %p170, %p171
      %s173 = ssub.s32 %s36, %s48
      %p174 = scmp.eq.s32.totalorder %s173, 0
      %s176 = sadd.s32 %s175, 1
      %s177 = scalar_select %p174, %s175, %s176
      %p180 = pneg %p174
      %p181 = scmp.eq.s32.totalorder %s29, 3
      %p182 = por %p180, %p181
      %p183 = scmp.ne.s32.totalorder %s175, %s178
      %p184 = scmp.eq.s32.totalorder %s29, 0
      %p185 = por %p183, %p184
      %p186 = scmp.ne.s32.totalorder %s175, %s178
      %p187 = scmp.eq.s32.totalorder %s34, 3
      %p188 = por %p186, %p187
      %p189 = scmp.ne.s32.totalorder %s178, %s179
      %p190 = scmp.eq.s32.totalorder %s34, 0
      %p191 = por %p189, %p190
      %p192 = scmp.ne.s32.totalorder %s178, %s179
      %p193 = scmp.eq.s32.totalorder %s35, 3
      %p194 = por %p192, %p193
      %p196 = scmp.ne.s32.totalorder %s179, %s195
      %p197 = scmp.eq.s32.totalorder %s35, 0
      %p198 = por %p196, %p197
      %s199 = ssub.s32 %s36, %s48
      %p200 = scmp.eq.s32.totalorder %s199, 0
      %s202 = sadd.s32 %s201, 1
      %s203 = scalar_select %p200, %s201, %s202
      %p206 = pneg %p200
      %p207 = scmp.eq.s32.totalorder %s29, 3
      %p208 = por %p206, %p207
      %p209 = scmp.ne.s32.totalorder %s201, %s204
      %p210 = scmp.eq.s32.totalorder %s29, 0
      %p211 = por %p209, %p210
      %p212 = scmp.ne.s32.totalorder %s201, %s204
      %p213 = scmp.eq.s32.totalorder %s34, 3
      %p214 = por %p212, %p213
      %p215 = scmp.ne.s32.totalorder %s204, %s205
      %p216 = scmp.eq.s32.totalorder %s34, 0
      %p217 = por %p215, %p216
      %p218 = scmp.ne.s32.totalorder %s204, %s205
      %p219 = scmp.eq.s32.totalorder %s35, 3
      %p220 = por %p218, %p219
      %p222 = scmp.ne.s32.totalorder %s205, %s221
      %p223 = scmp.eq.s32.totalorder %s35, 0
      %p224 = por %p222, %p223
      %s226 = sadd.s32 %s225, 1
      %p229 = scmp.eq.s32.totalorder %s29, 3
      %p230 = scmp.ne.s32.totalorder %s225, %s227
      %p231 = scmp.eq.s32.totalorder %s29, 0
      %p232 = por %p230, %p231
      %p233 = scmp.ne.s32.totalorder %s225, %s227
      %p234 = scmp.eq.s32.totalorder %s34, 3
      %p235 = por %p233, %p234
      %p236 = scmp.ne.s32.totalorder %s227, %s228
      %p237 = scmp.eq.s32.totalorder %s34, 0
      %p238 = por %p236, %p237
      %p239 = scmp.ne.s32.totalorder %s227, %s228
      %p240 = scmp.eq.s32.totalorder %s35, 3
      %p241 = por %p239, %p240
      %p243 = scmp.ne.s32.totalorder %s228, %s242
      %p244 = scmp.eq.s32.totalorder %s35, 0
      %p245 = por %p243, %p244
      %s247 = sadd.s32 %s246, 1
      %p250 = scmp.eq.s32.totalorder %s29, 3
      %p251 = scmp.ne.s32.totalorder %s246, %s248
      %p252 = scmp.eq.s32.totalorder %s29, 0
      %p253 = por %p251, %p252
      %p254 = scmp.ne.s32.totalorder %s246, %s248
      %p255 = scmp.eq.s32.totalorder %s34, 3
      %p256 = por %p254, %p255
      %p257 = scmp.ne.s32.totalorder %s248, %s249
      %p258 = scmp.eq.s32.totalorder %s34, 0
      %p259 = por %p257, %p258
      %p260 = scmp.ne.s32.totalorder %s248, %s249
      %p261 = scmp.eq.s32.totalorder %s35, 3
      %p262 = por %p260, %p261
      %p264 = scmp.ne.s32.totalorder %s249, %s263
      %p265 = scmp.eq.s32.totalorder %s35, 0
      %p266 = por %p264, %p265
      %s268 = sadd.s32 %s267, 1
      %p271 = scmp.eq.s32.totalorder %s29, 3
      %p272 = scmp.ne.s32.totalorder %s267, %s269
      %p273 = scmp.eq.s32.totalorder %s29, 0
      %p274 = por %p272, %p273
      %p275 = scmp.ne.s32.totalorder %s267, %s269
      %p276 = scmp.eq.s32.totalorder %s34, 3
      %p277 = por %p275, %p276
      %p278 = scmp.ne.s32.totalorder %s269, %s270
      %p279 = scmp.eq.s32.totalorder %s34, 0
      %p280 = por %p278, %p279
      %p281 = scmp.ne.s32.totalorder %s269, %s270
      %p282 = scmp.eq.s32.totalorder %s35, 3
      %p283 = por %p281, %p282
      %p285 = scmp.ne.s32.totalorder %s270, %s284
      %p286 = scmp.eq.s32.totalorder %s35, 0
      %p287 = por %p285, %p286
      %s288 = ssub.s32 %s36, %s48
      %p289 = scmp.eq.s32.totalorder %s288, 0
      %s291 = sadd.s32 %s290, 1
      %s292 = scalar_select %p289, %s290, %s291
      %p295 = pneg %p289
      %p296 = scmp.eq.s32.totalorder %s29, 3
      %p297 = por %p295, %p296
      %p298 = scmp.ne.s32.totalorder %s290, %s293
      %p299 = scmp.eq.s32.totalorder %s29, 0
      %p300 = por %p298, %p299
      %p301 = scmp.ne.s32.totalorder %s290, %s293
      %p302 = scmp.eq.s32.totalorder %s34, 3
      %p303 = por %p301, %p302
      %p304 = scmp.ne.s32.totalorder %s293, %s294
      %p305 = scmp.eq.s32.totalorder %s34, 0
      %p306 = por %p304, %p305
      %p307 = scmp.ne.s32.totalorder %s293, %s294
      %p308 = scmp.eq.s32.totalorder %s35, 3
      %p309 = por %p307, %p308
      %p311 = scmp.ne.s32.totalorder %s294, %s310
      %p312 = scmp.eq.s32.totalorder %s35, 0
      %p313 = por %p311, %p312
      %p314 = scmp.le.s32.totalorder 1, %s29
      %p315 = scmp.lt.s32.totalorder %s29, 5
      %p316 = pnand %p314, %p315
      %p317 = pneg %p316
      // Predicated region
      $region9: #{tpu_custom_call.1} parent=5 // pred_check
        _
      $region10: #{tpu_custom_call.1} parent=5 // pred_check_branch
        %319 = sbr.rel (%p316) target = $region12
      $region11: #{tpu_custom_call.1} parent=5 // pred_region
        %s320 = ssub.s32 %s29, 1
        // Predicated region
        $region13: #{tpu_custom_call.1} parent=11 // pred_check
          %p321 = pneg %p139
        $region14: #{tpu_custom_call.1} parent=11 // pred_check_branch
          %323 = sbr.rel (%p321) target = $region16
        $region15: #{tpu_custom_call.1} parent=11 // pred_region
          %p324 = scmp.lt.s32.totalorder %s38, 0
          %s325 = scalar_select %p324, %s38, 0
          %s326 = smul.addr %s325, 8
          %s327 = scalar_lea.vmem %s6, %s326
        $region16: #{tpu_custom_call.1} parent=11 // pred_fallthru
          _
        // Predicated region
        $region17: #{tpu_custom_call.1} parent=11 // pred_check
          %p328 = pneg %p165
        $region18: #{tpu_custom_call.1} parent=11 // pred_check_branch
          %330 = sbr.rel (%p328) target = $region20
        $region19: #{tpu_custom_call.1} parent=11 // pred_region
          %p331 = scmp.lt.s32.totalorder %s38, 0
          %s332 = scalar_select %p331, %s38, 0
          %s333 = smul.addr %s332, 8
          %s334 = scalar_lea.vmem %s7, %s333
        $region20: #{tpu_custom_call.1} parent=11 // pred_fallthru
          _
        // Predicated region
        $region21: #{tpu_custom_call.1} parent=11 // pred_check
          %p335 = pneg %p191
        $region22: #{tpu_custom_call.1} parent=11 // pred_check_branch
          %337 = sbr.rel (%p335) target = $region24
        $region23: #{tpu_custom_call.1} parent=11 // pred_region
          %p338 = scmp.lt.s32.totalorder %s38, 0
          %s339 = scalar_select %p338, %s38, 0
          %s340 = smul.addr %s339, 8
          %s341 = scalar_lea.vmem %s8, %s340
        $region24: #{tpu_custom_call.1} parent=11 // pred_fallthru
          _
        // Predicated region
        $region25: #{tpu_custom_call.1} parent=11 // pred_check
          %p342 = pneg %p217
        $region26: #{tpu_custom_call.1} parent=11 // pred_check_branch
          %344 = sbr.rel (%p342) target = $region28
        $region27: #{tpu_custom_call.1} parent=11 // pred_region
          %p345 = scmp.lt.s32.totalorder %s38, 0
          %s346 = scalar_select %p345, %s38, 0
          %s347 = smul.addr %s346, 8
          %s348 = scalar_lea.vmem %s9, %s347
        $region28: #{tpu_custom_call.1} parent=11 // pred_fallthru
          _
        // Predicated region
        $region29: #{tpu_custom_call.1} parent=11 // pred_check
          %p349 = pneg %p238
        $region30: #{tpu_custom_call.1} parent=11 // pred_check_branch
          %351 = sbr.rel (%p349) target = $region32
        $region31: #{tpu_custom_call.1} parent=11 // pred_region
          _
        $region32: #{tpu_custom_call.1} parent=11 // pred_fallthru
          _
        // Predicated region
        $region33: #{tpu_custom_call.1} parent=11 // pred_check
          %p352 = pneg %p259
        $region34: #{tpu_custom_call.1} parent=11 // pred_check_branch
          %354 = sbr.rel (%p352) target = $region36
        $region35: #{tpu_custom_call.1} parent=11 // pred_region
          _
        $region36: #{tpu_custom_call.1} parent=11 // pred_fallthru
          _
        // Predicated region
        $region37: #{tpu_custom_call.1} parent=11 // pred_check
          %p355 = pneg %p280
        $region38: #{tpu_custom_call.1} parent=11 // pred_check_branch
          %357 = sbr.rel (%p355) target = $region40
        $region39: #{tpu_custom_call.1} parent=11 // pred_region
          _
        $region40: #{tpu_custom_call.1} parent=11 // pred_fallthru
          _
      $region12: #{tpu_custom_call.1} parent=5 // pred_fallthru
        _
      %p358 = scmp.lt.s32.totalorder %s29, 4
      // Predicated region
      $region41: #{tpu_custom_call.1} parent=5 // pred_check
        %p359 = pneg %p358
      $region42: #{tpu_custom_call.1} parent=5 // pred_check_branch
        %361 = sbr.rel (%p359) target = $region44
      $region43: #{tpu_custom_call.1} parent=5 // pred_region
        // Predicated region
        $region45: #{tpu_custom_call.1} parent=43 // pred_check
          %p362 = pneg %p71
        $region46: #{tpu_custom_call.1} parent=43 // pred_check_branch
          %364 = sbr.rel (%p362) target = $region48
        $region47: #{tpu_custom_call.1} parent=43 // pred_region
          #allocation14 [shape = 'u32[6]{0}', space=smem, size = 0x18, scoped, tag = 'DMA stride descriptor']
          %s365 = sand.u32 %s61, 1
          %s366 = scalar_lea.sflag [#allocation10], %s365
          %s367 = sand.u32 %s61, 1
          %s368 = smul.addr %s367, 256
          %s369 = scalar_lea.vmem [#allocation9], %s368
          %s370 = sld [smem:[#allocation5 + %s36]]
          %s371 = ssub.s32 %s370, 1
          %p372 = scmp.lt.s32.totalorder %s37, %s371
          %s373 = scalar_select %p372, %s37, %s371
          %s374 = smul.u32 8, %s36
          %s375 = smul.u32 4, %s373
          %s377 = ssub.s32 4096, 4096
          %378 = vsyncadd %s366, %s377
          %s379 = smul.addr %s374, 16
          %s380 = sadd.s32 %s375, %s379
          %s381 = smul.addr %s380, 128
          %s382 = scalar_lea.hbm %s4, %s381
          %s384 = sshll.u32 1, 14
          %s385 = sxor.u32 4294967295, %s384
          %s387 = sld [smem:[#allocation0]]
          %s388 = sadd.s32 2, %s387
          %s390 = sshll.u32 7, 26
          %s391 = sxor.u32 4294967295, %s390
          %s392 = sand.u32 0, %s391
          %s393 = sshll.u32 %s388, 26
          %s394 = sor.u32 %s392, %s393
          %s395 = sshll.u32 %s369, 4
          %s396 = int_to_ptr.vmem [resolvable:$true] %s395
          %402 = sst [smem:[#allocation14]] 2048
          %s403 = scalar_lea.smem [#allocation14], 1
          %404 = sst [smem:[%s403]] 512
          %s405 = scalar_lea.smem [#allocation14], 2
          %406 = sst [smem:[%s405]] 4
          %s407 = scalar_lea.smem [#allocation14], 3
          %408 = sst [smem:[%s407]] 128
          %s409 = scalar_lea.smem [#allocation14], 4
          %410 = sst [smem:[%s409]] 128
          %s411 = scalar_lea.smem [#allocation14], 5
          %412 = sst [smem:[%s411]] 8
          %414 = dma.general %s382, 4096, %s396, %s366, [#allocation13], [#allocation14], %s394, 0
        $region48: #{tpu_custom_call.1} parent=43 // pred_fallthru
          _
        // Predicated region
        $region49: #{tpu_custom_call.1} parent=43 // pred_check
          %p415 = pneg %p107
        $region50: #{tpu_custom_call.1} parent=43 // pred_check_branch
          %417 = sbr.rel (%p415) target = $region52
        $region51: #{tpu_custom_call.1} parent=43 // pred_region
          #allocation16 [shape = 'u32[6]{0}', space=smem, size = 0x18, scoped, tag = 'DMA stride descriptor']
          %s418 = sand.u32 %s97, 1
          %s419 = scalar_lea.sflag [#allocation12], %s418
          %s420 = sand.u32 %s97, 1
          %s421 = smul.addr %s420, 256
          %s422 = scalar_lea.vmem [#allocation11], %s421
          %s423 = sld [smem:[#allocation6 + %s36]]
          %s424 = ssub.s32 %s423, 1
          %p425 = scmp.lt.s32.totalorder %s37, %s424
          %s426 = scalar_select %p425, %s37, %s424
          %s427 = smul.u32 8, %s36
          %s428 = smul.u32 4, %s426
          %s430 = ssub.s32 4096, 4096
          %431 = vsyncadd %s419, %s430
          %s432 = smul.addr %s427, 8
          %s433 = sadd.s32 %s428, %s432
          %s434 = smul.addr %s433, 128
          %s435 = scalar_lea.hbm %s5, %s434
          %s437 = sshll.u32 1, 14
          %s438 = sxor.u32 4294967295, %s437
          %s440 = sld [smem:[#allocation0]]
          %s441 = sadd.s32 2, %s440
          %s443 = sshll.u32 7, 26
          %s444 = sxor.u32 4294967295, %s443
          %s445 = sand.u32 0, %s444
          %s446 = sshll.u32 %s441, 26
          %s447 = sor.u32 %s445, %s446
          %s448 = sshll.u32 %s422, 4
          %s449 = int_to_ptr.vmem [resolvable:$true] %s448
          %455 = sst [smem:[#allocation16]] 1024
          %s456 = scalar_lea.smem [#allocation16], 1
          %457 = sst [smem:[%s456]] 512
          %s458 = scalar_lea.smem [#allocation16], 2
          %459 = sst [smem:[%s458]] 4
          %s460 = scalar_lea.smem [#allocation16], 3
          %461 = sst [smem:[%s460]] 128
          %s462 = scalar_lea.smem [#allocation16], 4
          %463 = sst [smem:[%s462]] 128
          %s464 = scalar_lea.smem [#allocation16], 5
          %465 = sst [smem:[%s464]] 8
          %467 = dma.general %s435, 4096, %s449, %s419, [#allocation15], [#allocation16], %s447, 0
        $region52: #{tpu_custom_call.1} parent=43 // pred_fallthru
          _
      $region44: #{tpu_custom_call.1} parent=5 // pred_fallthru
        _
      %p468 = scmp.le.s32.totalorder 1, %s29
      %p469 = scmp.lt.s32.totalorder %s29, 5
      %p470 = pnand %p468, %p469
      %p471 = pneg %p470
      // Predicated region
      $region53: #{tpu_custom_call.1} parent=5 // pred_check
        _
      $region54: #{tpu_custom_call.1} parent=5 // pred_check_branch
        %473 = sbr.rel (%p470) target = $region56
      $region55: #{tpu_custom_call.1} parent=5 // pred_region
        %s474 = ssub.s32 %s29, 1
        %s475 = sand.u32 %s64, 1
        %s476 = scalar_lea.sflag [#allocation10], %s475
        %s477 = sand.u32 %s64, 1
        %s478 = smul.addr %s477, 256
        %s479 = scalar_lea.vmem [#allocation9], %s478
        // Predicated region
        $region57: #{tpu_custom_call.1} parent=55 // pred_check
          %p480 = pneg %p77
        $region58: #{tpu_custom_call.1} parent=55 // pred_check_branch
          %482 = sbr.rel (%p480) target = $region60
        $region59: #{tpu_custom_call.1} parent=55 // pred_region
          %483 = dma.done %s476, 4096
        $region60: #{tpu_custom_call.1} parent=55 // pred_fallthru
          _
        %s484 = sand.u32 %s100, 1
        %s485 = scalar_lea.sflag [#allocation12], %s484
        %s486 = sand.u32 %s100, 1
        %s487 = smul.addr %s486, 256
        %s488 = scalar_lea.vmem [#allocation11], %s487
        // Predicated region
        $region61: #{tpu_custom_call.1} parent=55 // pred_check
          %p489 = pneg %p113
        $region62: #{tpu_custom_call.1} parent=55 // pred_check_branch
          %491 = sbr.rel (%p489) target = $region64
        $region63: #{tpu_custom_call.1} parent=55 // pred_region
          %492 = dma.done %s485, 4096
        $region64: #{tpu_custom_call.1} parent=55 // pred_fallthru
          _
        %s493 = sand.u32 %s64, 1
        %s494 = scalar_lea.sflag [#allocation10], %s493
        %s495 = sand.u32 %s64, 1
        %s496 = smul.addr %s495, 256
        %s497 = scalar_lea.vmem [#allocation9], %s496
        %p498 = pneg %p77
        %p499 = pneg %p74
        %s500 = sand.u32 %s100, 1
        %s501 = scalar_lea.sflag [#allocation12], %s500
        %s502 = sand.u32 %s100, 1
        %s503 = smul.addr %s502, 256
        %s504 = scalar_lea.vmem [#allocation11], %s503
        %p505 = pneg %p113
        %p506 = pneg %p110
        %p507 = scmp.lt.s32.totalorder %s38, 0
        %s508 = scalar_select %p507, %s38, 0
        %s509 = smul.addr %s508, 8
        %s510 = scalar_lea.vmem %s6, %s509
        %p511 = pneg %p139
        %p512 = pneg %p136
        %p513 = scmp.lt.s32.totalorder %s38, 0
        %s514 = scalar_select %p513, %s38, 0
        %s515 = smul.addr %s514, 8
        %s516 = scalar_lea.vmem %s7, %s515
        %p517 = pneg %p165
        %p518 = pneg %p162
        %p519 = scmp.lt.s32.totalorder %s38, 0
        %s520 = scalar_select %p519, %s38, 0
        %s521 = smul.addr %s520, 8
        %s522 = scalar_lea.vmem %s8, %s521
        %p523 = pneg %p191
        %p524 = pneg %p188
        %p525 = scmp.lt.s32.totalorder %s38, 0
        %s526 = scalar_select %p525, %s38, 0
        %s527 = smul.addr %s526, 8
        %s528 = scalar_lea.vmem %s9, %s527
        %p529 = pneg %p217
        %p530 = pneg %p214
        %p531 = pneg %p238
        %p532 = pneg %p235
        %p533 = pneg %p259
        %p534 = pneg %p256
        %p535 = pneg %p280
        %p536 = pneg %p277
        %p537 = pneg %p306
        %p538 = pneg %p303
        %p539 = scmp.lt.s32.totalorder %s38, 0
        %s540 = scalar_select %p539, %s38, 0
        %s541 = smul.addr %s540, 8
        %s542 = scalar_lea.vmem %s13, %s541
        %s543 = sld [smem:[#allocation5 + %s38]]
        %s544 = ssub.s32 %s543, 1
        %p545 = scmp.lt.s32.totalorder %s39, %s544
        %s546 = scalar_select %p545, %s39, %s544
        %s547 = smul.u32 8, %s38
        %s548 = smul.u32 4, %s546
        %s549 = sld [smem:[#allocation6 + %s38]]
        %s550 = ssub.s32 %s549, 1
        %p551 = scmp.lt.s32.totalorder %s39, %s550
        %s552 = scalar_select %p551, %s39, %s550
        %s553 = smul.u32 8, %s38
        %s554 = smul.u32 4, %s552
        %p555 = scmp.lt.s32.totalorder %s38, 0
        %s556 = scalar_select %p555, %s38, 0
        %s557 = smul.addr %s556, 8
        %s558 = scalar_lea.vmem %s6, %s557
        %p559 = scmp.lt.s32.totalorder %s38, 0
        %s560 = scalar_select %p559, %s38, 0
        %s561 = smul.addr %s560, 8
        %s562 = scalar_lea.vmem %s7, %s561
        %p563 = scmp.lt.s32.totalorder %s38, 0
        %s564 = scalar_select %p563, %s38, 0
        %s565 = smul.addr %s564, 8
        %s566 = scalar_lea.vmem %s8, %s565
        %p567 = scmp.lt.s32.totalorder %s38, 0
        %s568 = scalar_select %p567, %s38, 0
        %s569 = smul.addr %s568, 8
        %s570 = scalar_lea.vmem %s9, %s569
        %p571 = scmp.lt.s32.totalorder %s38, 0
        %s572 = scalar_select %p571, %s38, 0
        %s573 = smul.addr %s572, 8
        %s574 = scalar_lea.vmem %s13, %s573
        %p575 = scmp.eq.s32.totalorder %s39, 0
        // Predicated region
        $region65: #{tpu_custom_call.1} parent=55 // pred_check
          %p576 = pneg %p575
        $region66: #{tpu_custom_call.1} parent=55 // pred_check_branch
          %578 = sbr.rel (%p576) target = $region68
        $region67: #{tpu_custom_call.1} parent=55 // pred_region
          %579 = vst [vmem:[#allocation2] sm:$0xff] 0.0
          %vm580 = vcmask 523264
          %581 = vst.msk [vmem:[#allocation3] sm:$0xff] %vm580, 0.0
        $region68: #{tpu_custom_call.1} parent=55 // pred_fallthru
          _
        %s582 = sld [smem:[#allocation7 + %s38]]
        %s583 = sld [smem:[#allocation5 + %s38]]
        %s584 = sld [smem:[#allocation8 + %s38]]
        %s585 = sld [smem:[#allocation6 + %s38]]
        %p586 = scmp.lt.s32.totalorder %s39, %s582
        // Predicated region
        $region69: #{tpu_custom_call.1} parent=55 // pred_check
          %p587 = pneg %p586
        $region70: #{tpu_custom_call.1} parent=55 // pred_check_branch
          %589 = sbr.rel (%p587) target = $region72
        $region71: #{tpu_custom_call.1} parent=55 // pred_region
          %v590 = vld [vmem:[#allocation2] sm:$0xff]
          %v591 = vld [vmem:[%s479] sm:$0xff]
          %v592 = vld [vmem:[%s479 + $0x8] sm:$0xff]
          %v593 = vld [vmem:[%s479 + $0x10] sm:$0xff]
          %v594 = vld [vmem:[%s479 + $0x18] sm:$0xff]
          %v595 = vld [vmem:[%s479 + $0x20] sm:$0xff]
          %v596 = vld [vmem:[%s479 + $0x28] sm:$0xff]
          %v597 = vld [vmem:[%s479 + $0x30] sm:$0xff]
          %v598 = vld [vmem:[%s479 + $0x38] sm:$0xff]
          %v599 = vld [vmem:[%s479 + $0x40] sm:$0xff]
          %v600 = vld [vmem:[%s479 + $0x48] sm:$0xff]
          %v601 = vld [vmem:[%s479 + $0x50] sm:$0xff]
          %v602 = vld [vmem:[%s479 + $0x58] sm:$0xff]
          %v603 = vld [vmem:[%s479 + $0x60] sm:$0xff]
          %v604 = vld [vmem:[%s479 + $0x68] sm:$0xff]
          %v605 = vld [vmem:[%s479 + $0x70] sm:$0xff]
          %v606 = vld [vmem:[%s479 + $0x78] sm:$0xff]
          %v607 = vld [vmem:[%s479 + $0x80] sm:$0xff]
          %v608 = vld [vmem:[%s479 + $0x88] sm:$0xff]
          %v609 = vld [vmem:[%s479 + $0x90] sm:$0xff]
          %v610 = vld [vmem:[%s479 + $0x98] sm:$0xff]
          %v611 = vld [vmem:[%s479 + $0xa0] sm:$0xff]
          %v612 = vld [vmem:[%s479 + $0xa8] sm:$0xff]
          %v613 = vld [vmem:[%s479 + $0xb0] sm:$0xff]
          %v614 = vld [vmem:[%s479 + $0xb8] sm:$0xff]
          %v615 = vld [vmem:[%s479 + $0xc0] sm:$0xff]
          %v616 = vld [vmem:[%s479 + $0xc8] sm:$0xff]
          %v617 = vld [vmem:[%s479 + $0xd0] sm:$0xff]
          %v618 = vld [vmem:[%s479 + $0xd8] sm:$0xff]
          %v619 = vld [vmem:[%s479 + $0xe0] sm:$0xff]
          %v620 = vld [vmem:[%s479 + $0xe8] sm:$0xff]
          %v621 = vld [vmem:[%s479 + $0xf0] sm:$0xff]
          %v622 = vld [vmem:[%s479 + $0xf8] sm:$0xff]
          %v623 = vadd.f32 %v591, %v592
          %v624 = vadd.f32 %v623, %v593
          %v625 = vadd.f32 %v624, %v594
          %v626 = vrot.slane %v625, 4
          %v627 = vadd.f32 %v625, %v626
          %v628 = vrot.slane %v627, 2
          %v629 = vadd.f32 %v627, %v628
          %v630 = vrot.slane %v629, 1
          %v631 = vadd.f32 %v629, %v630
          %v632 = vadd.f32 %v595, %v596
          %v633 = vadd.f32 %v632, %v597
          %v634 = vadd.f32 %v633, %v598
          %v635 = vrot.slane %v634, 4
          %v636 = vadd.f32 %v634, %v635
          %v637 = vrot.slane %v636, 2
          %v638 = vadd.f32 %v636, %v637
          %v639 = vrot.slane %v638, 1
          %v640 = vadd.f32 %v638, %v639
          %v641 = vadd.f32 %v599, %v600
          %v642 = vadd.f32 %v641, %v601
          %v643 = vadd.f32 %v642, %v602
          %v644 = vrot.slane %v643, 4
          %v645 = vadd.f32 %v643, %v644
          %v646 = vrot.slane %v645, 2
          %v647 = vadd.f32 %v645, %v646
          %v648 = vrot.slane %v647, 1
          %v649 = vadd.f32 %v647, %v648
          %v650 = vadd.f32 %v603, %v604
          %v651 = vadd.f32 %v650, %v605
          %v652 = vadd.f32 %v651, %v606
          %v653 = vrot.slane %v652, 4
          %v654 = vadd.f32 %v652, %v653
          %v655 = vrot.slane %v654, 2
          %v656 = vadd.f32 %v654, %v655
          %v657 = vrot.slane %v656, 1
          %v658 = vadd.f32 %v656, %v657
          %v659 = vadd.f32 %v607, %v608
          %v660 = vadd.f32 %v659, %v609
          %v661 = vadd.f32 %v660, %v610
          %v662 = vrot.slane %v661, 4
          %v663 = vadd.f32 %v661, %v662
          %v664 = vrot.slane %v663, 2
          %v665 = vadd.f32 %v663, %v664
          %v666 = vrot.slane %v665, 1
          %v667 = vadd.f32 %v665, %v666
          %v668 = vadd.f32 %v611, %v612
          %v669 = vadd.f32 %v668, %v613
          %v670 = vadd.f32 %v669, %v614
          %v671 = vrot.slane %v670, 4
          %v672 = vadd.f32 %v670, %v671
          %v673 = vrot.slane %v672, 2
          %v674 = vadd.f32 %v672, %v673
          %v675 = vrot.slane %v674, 1
          %v676 = vadd.f32 %v674, %v675
          %v677 = vadd.f32 %v615, %v616
          %v678 = vadd.f32 %v677, %v617
          %v679 = vadd.f32 %v678, %v618
          %v680 = vrot.slane %v679, 4
          %v681 = vadd.f32 %v679, %v680
          %v682 = vrot.slane %v681, 2
          %v683 = vadd.f32 %v681, %v682
          %v684 = vrot.slane %v683, 1
          %v685 = vadd.f32 %v683, %v684
          %v686 = vadd.f32 %v619, %v620
          %v687 = vadd.f32 %v686, %v621
          %v688 = vadd.f32 %v687, %v622
          %v689 = vrot.slane %v688, 4
          %v690 = vadd.f32 %v688, %v689
          %v691 = vrot.slane %v690, 2
          %v692 = vadd.f32 %v690, %v691
          %v693 = vrot.slane %v692, 1
          %v694 = vadd.f32 %v692, %v693
          %vm703 = vcmask 1041409
          %v704 = vsel %vm703, %v640, %v631
          %vm705 = vcmask 1042434
          %v706 = vsel %vm705, %v649, %v704
          %vm707 = vcmask 1043459
          %v708 = vsel %vm707, %v658, %v706
          %vm709 = vcmask 1044484
          %v710 = vsel %vm709, %v667, %v708
          %vm711 = vcmask 1045509
          %v712 = vsel %vm711, %v676, %v710
          %vm713 = vcmask 1046534
          %v714 = vsel %vm713, %v685, %v712
          %vm715 = vcmask 1047559
          %v716 = vsel %vm715, %v694, %v714
          %v718 = vadd.f32 %v590, %v716
          %719 = vst [vmem:[#allocation2] sm:$0xff] %v718
        $region72: #{tpu_custom_call.1} parent=55 // pred_fallthru
          _
        %p720 = scmp.ge.s32.totalorder %s39, %s582
        %p721 = scmp.lt.s32.totalorder %s39, %s583
        %p722 = pnand %p720, %p721
        %p723 = pneg %p722
        // Predicated region
        $region73: #{tpu_custom_call.1} parent=55 // pred_check
          _
        $region74: #{tpu_custom_call.1} parent=55 // pred_check_branch
          %725 = sbr.rel (%p722) target = $region76
        $region75: #{tpu_custom_call.1} parent=55 // pred_region
          %s726 = smul.u32 %s39, 32
          %v727 = vlaneseq
          %v728 = vshrl.u32 %v727, 7
          %v729 = vadd.s32 %v728, 8
          %v730 = vadd.s32 %v728, 16
          %v731 = vadd.s32 %v728, 24
          %v732 = vstv %s726
          %v733 = vadd.s32 %v732, %v728
          %v734 = vadd.s32 %v732, %v729
          %v735 = vadd.s32 %v732, %v730
          %v736 = vadd.s32 %v732, %v731
          %v737 = vld [vmem:[%s558] sm:$0xff]
          %v738 = vcombine.high %v737, %v737
          %v740 = vunpack.c.l.s4 1966171168
          %v741 = vunpack.c.0.s8 %v740
          %v742 = vlaneseq
          %v743 = vshrl.u32 %v742, 7
          %v744 = vsub.s32 %v741, %v743
          %v745 = vrot.slane %v737, %v744
          %v747 = vunpack.c.l.s4 1966171168
          %v748 = vunpack.c.0.s8 %v747
          %v749 = vlaneseq
          %v750 = vshrl.u32 %v749, 7
          %v751 = vsub.s32 %v748, %v750
          %v752 = vrot.slane %v738, %v751
          %v753 = vcombine.high %v745, %v745
          %v754 = vcombine.high %v752, %v752
          %v756 = vunpack.c.l.s4 1966171168
          %v757 = vunpack.c.0.s8 %v756
          %v758 = vlaneseq
          %v759 = vshrl.u32 %v758, 7
          %v760 = vsub.s32 %v757, %v759
          %v761 = vrot.slane %v745, %v760
          %v763 = vunpack.c.l.s4 1966171168
          %v764 = vunpack.c.0.s8 %v763
          %v765 = vlaneseq
          %v766 = vshrl.u32 %v765, 7
          %v767 = vsub.s32 %v764, %v766
          %v768 = vrot.slane %v752, %v767
          %v770 = vunpack.c.l.s4 1966171168
          %v771 = vunpack.c.0.s8 %v770
          %v772 = vlaneseq
          %v773 = vshrl.u32 %v772, 7
          %v774 = vsub.s32 %v771, %v773
          %v775 = vrot.slane %v753, %v774
          %v777 = vunpack.c.l.s4 1966171168
          %v778 = vunpack.c.0.s8 %v777
          %v779 = vlaneseq
          %v780 = vshrl.u32 %v779, 7
          %v781 = vsub.s32 %v778, %v780
          %v782 = vrot.slane %v754, %v781
          %v783 = vcombine.high %v761, %v761
          %v784 = vcombine.high %v768, %v768
          %v785 = vcombine.high %v775, %v775
          %v786 = vcombine.high %v782, %v782
          %v787 = vlaneseq
          %v788 = vshrl.u32 %v787, 7
          %v789 = vsub.s32 0, %v788
          %v790 = vrot.slane %v761, %v789
          %v791 = vlaneseq
          %v792 = vshrl.u32 %v791, 7
          %v793 = vsub.s32 0, %v792
          %v794 = vrot.slane %v775, %v793
          %v795 = vlaneseq
          %v796 = vshrl.u32 %v795, 7
          %v797 = vsub.s32 0, %v796
          %v798 = vrot.slane %v783, %v797
          %v799 = vlaneseq
          %v800 = vshrl.u32 %v799, 7
          %v801 = vsub.s32 0, %v800
          %v802 = vrot.slane %v785, %v801
          %v803 = vlaneseq
          %v804 = vshrl.u32 %v803, 7
          %v805 = vsub.s32 0, %v804
          %v806 = vrot.slane %v768, %v805
          %v807 = vlaneseq
          %v808 = vshrl.u32 %v807, 7
          %v809 = vsub.s32 0, %v808
          %v810 = vrot.slane %v782, %v809
          %v811 = vlaneseq
          %v812 = vshrl.u32 %v811, 7
          %v813 = vsub.s32 0, %v812
          %v814 = vrot.slane %v784, %v813
          %v815 = vlaneseq
          %v816 = vshrl.u32 %v815, 7
          %v817 = vsub.s32 0, %v816
          %v818 = vrot.slane %v786, %v817
          %819 = vset.pattern.permute.xlu0 0
          %820 = vperm.xlu0 %819, %v790
          %v821 = vpop.permute.xlu0 %820
          %822 = vset.pattern.permute.xlu0 0
          %823 = vperm.xlu0 %822, %v794
          %v824 = vpop.permute.xlu0 %823
          %825 = vset.pattern.permute.xlu0 0
          %826 = vperm.xlu0 %825, %v798
          %v827 = vpop.permute.xlu0 %826
          %828 = vset.pattern.permute.xlu0 0
          %829 = vperm.xlu0 %828, %v802
          %v830 = vpop.permute.xlu0 %829
          %831 = vset.pattern.permute.xlu0 0
          %832 = vperm.xlu0 %831, %v806
          %v833 = vpop.permute.xlu0 %832
          %834 = vset.pattern.permute.xlu0 0
          %835 = vperm.xlu0 %834, %v810
          %v836 = vpop.permute.xlu0 %835
          %837 = vset.pattern.permute.xlu0 0
          %838 = vperm.xlu0 %837, %v814
          %v839 = vpop.permute.xlu0 %838
          %840 = vset.pattern.permute.xlu0 0
          %841 = vperm.xlu0 %840, %v818
          %v842 = vpop.permute.xlu0 %841
          %vm843 = vcmp.lt.s32.totalorder %v733, %v821
          %vm844 = vcmp.lt.s32.totalorder %v734, %v821
          %vm845 = vcmp.lt.s32.totalorder %v735, %v821
          %vm846 = vcmp.lt.s32.totalorder %v736, %v821
          %vm847 = vcmp.lt.s32.totalorder %v733, %v824
          %vm848 = vcmp.lt.s32.totalorder %v734, %v824
          %vm849 = vcmp.lt.s32.totalorder %v735, %v824
          %vm850 = vcmp.lt.s32.totalorder %v736, %v824
          %vm851 = vcmp.lt.s32.totalorder %v733, %v827
          %vm852 = vcmp.lt.s32.totalorder %v734, %v827
          %vm853 = vcmp.lt.s32.totalorder %v735, %v827
          %vm854 = vcmp.lt.s32.totalorder %v736, %v827
          %vm855 = vcmp.lt.s32.totalorder %v733, %v830
          %vm856 = vcmp.lt.s32.totalorder %v734, %v830
          %vm857 = vcmp.lt.s32.totalorder %v735, %v830
          %vm858 = vcmp.lt.s32.totalorder %v736, %v830
          %vm859 = vcmp.lt.s32.totalorder %v733, %v833
          %vm860 = vcmp.lt.s32.totalorder %v734, %v833
          %vm861 = vcmp.lt.s32.totalorder %v735, %v833
          %vm862 = vcmp.lt.s32.totalorder %v736, %v833
          %vm863 = vcmp.lt.s32.totalorder %v733, %v836
          %vm864 = vcmp.lt.s32.totalorder %v734, %v836
          %vm865 = vcmp.lt.s32.totalorder %v735, %v836
          %vm866 = vcmp.lt.s32.totalorder %v736, %v836
          %vm867 = vcmp.lt.s32.totalorder %v733, %v839
          %vm868 = vcmp.lt.s32.totalorder %v734, %v839
          %vm869 = vcmp.lt.s32.totalorder %v735, %v839
          %vm870 = vcmp.lt.s32.totalorder %v736, %v839
          %vm871 = vcmp.lt.s32.totalorder %v733, %v842
          %vm872 = vcmp.lt.s32.totalorder %v734, %v842
          %vm873 = vcmp.lt.s32.totalorder %v735, %v842
          %vm874 = vcmp.lt.s32.totalorder %v736, %v842
          %v875 = vld [vmem:[#allocation2] sm:$0xff]
          %v876 = vld [vmem:[%s479] sm:$0xff]
          %v877 = vld [vmem:[%s479 + $0x8] sm:$0xff]
          %v878 = vld [vmem:[%s479 + $0x10] sm:$0xff]
          %v879 = vld [vmem:[%s479 + $0x18] sm:$0xff]
          %v880 = vld [vmem:[%s479 + $0x20] sm:$0xff]
          %v881 = vld [vmem:[%s479 + $0x28] sm:$0xff]
          %v882 = vld [vmem:[%s479 + $0x30] sm:$0xff]
          %v883 = vld [vmem:[%s479 + $0x38] sm:$0xff]
          %v884 = vld [vmem:[%s479 + $0x40] sm:$0xff]
          %v885 = vld [vmem:[%s479 + $0x48] sm:$0xff]
          %v886 = vld [vmem:[%s479 + $0x50] sm:$0xff]
          %v887 = vld [vmem:[%s479 + $0x58] sm:$0xff]
          %v888 = vld [vmem:[%s479 + $0x60] sm:$0xff]
          %v889 = vld [vmem:[%s479 + $0x68] sm:$0xff]
          %v890 = vld [vmem:[%s479 + $0x70] sm:$0xff]
          %v891 = vld [vmem:[%s479 + $0x78] sm:$0xff]
          %v892 = vld [vmem:[%s479 + $0x80] sm:$0xff]
          %v893 = vld [vmem:[%s479 + $0x88] sm:$0xff]
          %v894 = vld [vmem:[%s479 + $0x90] sm:$0xff]
          %v895 = vld [vmem:[%s479 + $0x98] sm:$0xff]
          %v896 = vld [vmem:[%s479 + $0xa0] sm:$0xff]
          %v897 = vld [vmem:[%s479 + $0xa8] sm:$0xff]
          %v898 = vld [vmem:[%s479 + $0xb0] sm:$0xff]
          %v899 = vld [vmem:[%s479 + $0xb8] sm:$0xff]
          %v900 = vld [vmem:[%s479 + $0xc0] sm:$0xff]
          %v901 = vld [vmem:[%s479 + $0xc8] sm:$0xff]
          %v902 = vld [vmem:[%s479 + $0xd0] sm:$0xff]
          %v903 = vld [vmem:[%s479 + $0xd8] sm:$0xff]
          %v904 = vld [vmem:[%s479 + $0xe0] sm:$0xff]
          %v905 = vld [vmem:[%s479 + $0xe8] sm:$0xff]
          %v906 = vld [vmem:[%s479 + $0xf0] sm:$0xff]
          %v907 = vld [vmem:[%s479 + $0xf8] sm:$0xff]
          %v908 = vsel %vm843, %v876, 0.0
          %v909 = vsel %vm844, %v877, 0.0
          %v910 = vsel %vm845, %v878, 0.0
          %v911 = vsel %vm846, %v879, 0.0
          %v912 = vsel %vm847, %v880, 0.0
          %v913 = vsel %vm848, %v881, 0.0
          %v914 = vsel %vm849, %v882, 0.0
          %v915 = vsel %vm850, %v883, 0.0
          %v916 = vsel %vm851, %v884, 0.0
          %v917 = vsel %vm852, %v885, 0.0
          %v918 = vsel %vm853, %v886, 0.0
          %v919 = vsel %vm854, %v887, 0.0
          %v920 = vsel %vm855, %v888, 0.0
          %v921 = vsel %vm856, %v889, 0.0
          %v922 = vsel %vm857, %v890, 0.0
          %v923 = vsel %vm858, %v891, 0.0
          %v924 = vsel %vm859, %v892, 0.0
          %v925 = vsel %vm860, %v893, 0.0
          %v926 = vsel %vm861, %v894, 0.0
          %v927 = vsel %vm862, %v895, 0.0
          %v928 = vsel %vm863, %v896, 0.0
          %v929 = vsel %vm864, %v897, 0.0
          %v930 = vsel %vm865, %v898, 0.0
          %v931 = vsel %vm866, %v899, 0.0
          %v932 = vsel %vm867, %v900, 0.0
          %v933 = vsel %vm868, %v901, 0.0
          %v934 = vsel %vm869, %v902, 0.0
          %v935 = vsel %vm870, %v903, 0.0
          %v936 = vsel %vm871, %v904, 0.0
          %v937 = vsel %vm872, %v905, 0.0
          %v938 = vsel %vm873, %v906, 0.0
          %v939 = vsel %vm874, %v907, 0.0
          %v940 = vadd.f32 %v908, %v909
          %v941 = vadd.f32 %v940, %v910
          %v942 = vadd.f32 %v941, %v911
          %v943 = vrot.slane %v942, 4
          %v944 = vadd.f32 %v942, %v943
          %v945 = vrot.slane %v944, 2
          %v946 = vadd.f32 %v944, %v945
          %v947 = vrot.slane %v946, 1
          %v948 = vadd.f32 %v946, %v947
          %v949 = vadd.f32 %v912, %v913
          %v950 = vadd.f32 %v949, %v914
          %v951 = vadd.f32 %v950, %v915
          %v952 = vrot.slane %v951, 4
          %v953 = vadd.f32 %v951, %v952
          %v954 = vrot.slane %v953, 2
          %v955 = vadd.f32 %v953, %v954
          %v956 = vrot.slane %v955, 1
          %v957 = vadd.f32 %v955, %v956
          %v958 = vadd.f32 %v916, %v917
          %v959 = vadd.f32 %v958, %v918
          %v960 = vadd.f32 %v959, %v919
          %v961 = vrot.slane %v960, 4
          %v962 = vadd.f32 %v960, %v961
          %v963 = vrot.slane %v962, 2
          %v964 = vadd.f32 %v962, %v963
          %v965 = vrot.slane %v964, 1
          %v966 = vadd.f32 %v964, %v965
          %v967 = vadd.f32 %v920, %v921
          %v968 = vadd.f32 %v967, %v922
          %v969 = vadd.f32 %v968, %v923
          %v970 = vrot.slane %v969, 4
          %v971 = vadd.f32 %v969, %v970
          %v972 = vrot.slane %v971, 2
          %v973 = vadd.f32 %v971, %v972
          %v974 = vrot.slane %v973, 1
          %v975 = vadd.f32 %v973, %v974
          %v976 = vadd.f32 %v924, %v925
          %v977 = vadd.f32 %v976, %v926
          %v978 = vadd.f32 %v977, %v927
          %v979 = vrot.slane %v978, 4
          %v980 = vadd.f32 %v978, %v979
          %v981 = vrot.slane %v980, 2
          %v982 = vadd.f32 %v980, %v981
          %v983 = vrot.slane %v982, 1
          %v984 = vadd.f32 %v982, %v983
          %v985 = vadd.f32 %v928, %v929
          %v986 = vadd.f32 %v985, %v930
          %v987 = vadd.f32 %v986, %v931
          %v988 = vrot.slane %v987, 4
          %v989 = vadd.f32 %v987, %v988
          %v990 = vrot.slane %v989, 2
          %v991 = vadd.f32 %v989, %v990
          %v992 = vrot.slane %v991, 1
          %v993 = vadd.f32 %v991, %v992
          %v994 = vadd.f32 %v932, %v933
          %v995 = vadd.f32 %v994, %v934
          %v996 = vadd.f32 %v995, %v935
          %v997 = vrot.slane %v996, 4
          %v998 = vadd.f32 %v996, %v997
          %v999 = vrot.slane %v998, 2
          %v1000 = vadd.f32 %v998, %v999
          %v1001 = vrot.slane %v1000, 1
          %v1002 = vadd.f32 %v1000, %v1001
          %v1003 = vadd.f32 %v936, %v937
          %v1004 = vadd.f32 %v1003, %v938
          %v1005 = vadd.f32 %v1004, %v939
          %v1006 = vrot.slane %v1005, 4
          %v1007 = vadd.f32 %v1005, %v1006
          %v1008 = vrot.slane %v1007, 2
          %v1009 = vadd.f32 %v1007, %v1008
          %v1010 = vrot.slane %v1009, 1
          %v1011 = vadd.f32 %v1009, %v1010
          %vm1020 = vcmask 1041409
          %v1021 = vsel %vm1020, %v957, %v948
          %vm1022 = vcmask 1042434
          %v1023 = vsel %vm1022, %v966, %v1021
          %vm1024 = vcmask 1043459
          %v1025 = vsel %vm1024, %v975, %v1023
          %vm1026 = vcmask 1044484
          %v1027 = vsel %vm1026, %v984, %v1025
          %vm1028 = vcmask 1045509
          %v1029 = vsel %vm1028, %v993, %v1027
          %vm1030 = vcmask 1046534
          %v1031 = vsel %vm1030, %v1002, %v1029
          %vm1032 = vcmask 1047559
          %v1033 = vsel %vm1032, %v1011, %v1031
          %v1035 = vadd.f32 %v875, %v1033
          %1036 = vst [vmem:[#allocation2] sm:$0xff] %v1035
        $region76: #{tpu_custom_call.1} parent=55 // pred_fallthru
          _
        %p1037 = scmp.lt.s32.totalorder %s39, %s584
        // Predicated region
        $region77: #{tpu_custom_call.1} parent=55 // pred_check
          %p1038 = pneg %p1037
        $region78: #{tpu_custom_call.1} parent=55 // pred_check_branch
          %1040 = sbr.rel (%p1038) target = $region80
        $region79: #{tpu_custom_call.1} parent=55 // pred_region
          %v1041 = vld [vmem:[#allocation3] sm:$0xff]
          %v1042 = vld [vmem:[%s488] sm:$0xff]
          %v1043 = vld [vmem:[%s488 + $0x8] sm:$0xff]
          %v1044 = vld [vmem:[%s488 + $0x10] sm:$0xff]
          %v1045 = vld [vmem:[%s488 + $0x18] sm:$0xff]
          %v1046 = vld [vmem:[%s488 + $0x20] sm:$0xff]
          %v1047 = vld [vmem:[%s488 + $0x28] sm:$0xff]
          %v1048 = vld [vmem:[%s488 + $0x30] sm:$0xff]
          %v1049 = vld [vmem:[%s488 + $0x38] sm:$0xff]
          %v1050 = vld [vmem:[%s488 + $0x40] sm:$0xff]
          %v1051 = vld [vmem:[%s488 + $0x48] sm:$0xff]
          %v1052 = vld [vmem:[%s488 + $0x50] sm:$0xff]
          %v1053 = vld [vmem:[%s488 + $0x58] sm:$0xff]
          %v1054 = vld [vmem:[%s488 + $0x60] sm:$0xff]
          %v1055 = vld [vmem:[%s488 + $0x68] sm:$0xff]
          %v1056 = vld [vmem:[%s488 + $0x70] sm:$0xff]
          %v1057 = vld [vmem:[%s488 + $0x78] sm:$0xff]
          %v1058 = vld [vmem:[%s488 + $0x80] sm:$0xff]
          %v1059 = vld [vmem:[%s488 + $0x88] sm:$0xff]
          %v1060 = vld [vmem:[%s488 + $0x90] sm:$0xff]
          %v1061 = vld [vmem:[%s488 + $0x98] sm:$0xff]
          %v1062 = vld [vmem:[%s488 + $0xa0] sm:$0xff]
          %v1063 = vld [vmem:[%s488 + $0xa8] sm:$0xff]
          %v1064 = vld [vmem:[%s488 + $0xb0] sm:$0xff]
          %v1065 = vld [vmem:[%s488 + $0xb8] sm:$0xff]
          %v1066 = vld [vmem:[%s488 + $0xc0] sm:$0xff]
          %v1067 = vld [vmem:[%s488 + $0xc8] sm:$0xff]
          %v1068 = vld [vmem:[%s488 + $0xd0] sm:$0xff]
          %v1069 = vld [vmem:[%s488 + $0xd8] sm:$0xff]
          %v1070 = vld [vmem:[%s488 + $0xe0] sm:$0xff]
          %v1071 = vld [vmem:[%s488 + $0xe8] sm:$0xff]
          %v1072 = vld [vmem:[%s488 + $0xf0] sm:$0xff]
          %v1073 = vld [vmem:[%s488 + $0xf8] sm:$0xff]
          %vm1074 = vcmask 523264
          %v1075 = vsel %vm1074, %v1042, 0.0
          %v1076 = vsel %vm1074, %v1043, 0.0
          %v1077 = vadd.f32 %v1075, %v1076
          %v1078 = vsel %vm1074, %v1044, 0.0
          %v1079 = vadd.f32 %v1077, %v1078
          %v1080 = vsel %vm1074, %v1045, 0.0
          %v1081 = vadd.f32 %v1079, %v1080
          %v1082 = vrot.slane %v1081, 4
          %v1083 = vadd.f32 %v1081, %v1082
          %v1084 = vrot.slane %v1083, 2
          %v1085 = vadd.f32 %v1083, %v1084
          %v1086 = vrot.slane %v1085, 1
          %v1087 = vadd.f32 %v1085, %v1086
          %v1088 = vsel %vm1074, %v1046, 0.0
          %v1089 = vsel %vm1074, %v1047, 0.0
          %v1090 = vadd.f32 %v1088, %v1089
          %v1091 = vsel %vm1074, %v1048, 0.0
          %v1092 = vadd.f32 %v1090, %v1091
          %v1093 = vsel %vm1074, %v1049, 0.0
          %v1094 = vadd.f32 %v1092, %v1093
          %v1095 = vrot.slane %v1094, 4
          %v1096 = vadd.f32 %v1094, %v1095
          %v1097 = vrot.slane %v1096, 2
          %v1098 = vadd.f32 %v1096, %v1097
          %v1099 = vrot.slane %v1098, 1
          %v1100 = vadd.f32 %v1098, %v1099
          %v1101 = vsel %vm1074, %v1050, 0.0
          %v1102 = vsel %vm1074, %v1051, 0.0
          %v1103 = vadd.f32 %v1101, %v1102
          %v1104 = vsel %vm1074, %v1052, 0.0
          %v1105 = vadd.f32 %v1103, %v1104
          %v1106 = vsel %vm1074, %v1053, 0.0
          %v1107 = vadd.f32 %v1105, %v1106
          %v1108 = vrot.slane %v1107, 4
          %v1109 = vadd.f32 %v1107, %v1108
          %v1110 = vrot.slane %v1109, 2
          %v1111 = vadd.f32 %v1109, %v1110
          %v1112 = vrot.slane %v1111, 1
          %v1113 = vadd.f32 %v1111, %v1112
          %v1114 = vsel %vm1074, %v1054, 0.0
          %v1115 = vsel %vm1074, %v1055, 0.0
          %v1116 = vadd.f32 %v1114, %v1115
          %v1117 = vsel %vm1074, %v1056, 0.0
          %v1118 = vadd.f32 %v1116, %v1117
          %v1119 = vsel %vm1074, %v1057, 0.0
          %v1120 = vadd.f32 %v1118, %v1119
          %v1121 = vrot.slane %v1120, 4
          %v1122 = vadd.f32 %v1120, %v1121
          %v1123 = vrot.slane %v1122, 2
          %v1124 = vadd.f32 %v1122, %v1123
          %v1125 = vrot.slane %v1124, 1
          %v1126 = vadd.f32 %v1124, %v1125
          %v1127 = vsel %vm1074, %v1058, 0.0
          %v1128 = vsel %vm1074, %v1059, 0.0
          %v1129 = vadd.f32 %v1127, %v1128
          %v1130 = vsel %vm1074, %v1060, 0.0
          %v1131 = vadd.f32 %v1129, %v1130
          %v1132 = vsel %vm1074, %v1061, 0.0
          %v1133 = vadd.f32 %v1131, %v1132
          %v1134 = vrot.slane %v1133, 4
          %v1135 = vadd.f32 %v1133, %v1134
          %v1136 = vrot.slane %v1135, 2
          %v1137 = vadd.f32 %v1135, %v1136
          %v1138 = vrot.slane %v1137, 1
          %v1139 = vadd.f32 %v1137, %v1138
          %v1140 = vsel %vm1074, %v1062, 0.0
          %v1141 = vsel %vm1074, %v1063, 0.0
          %v1142 = vadd.f32 %v1140, %v1141
          %v1143 = vsel %vm1074, %v1064, 0.0
          %v1144 = vadd.f32 %v1142, %v1143
          %v1145 = vsel %vm1074, %v1065, 0.0
          %v1146 = vadd.f32 %v1144, %v1145
          %v1147 = vrot.slane %v1146, 4
          %v1148 = vadd.f32 %v1146, %v1147
          %v1149 = vrot.slane %v1148, 2
          %v1150 = vadd.f32 %v1148, %v1149
          %v1151 = vrot.slane %v1150, 1
          %v1152 = vadd.f32 %v1150, %v1151
          %v1153 = vsel %vm1074, %v1066, 0.0
          %v1154 = vsel %vm1074, %v1067, 0.0
          %v1155 = vadd.f32 %v1153, %v1154
          %v1156 = vsel %vm1074, %v1068, 0.0
          %v1157 = vadd.f32 %v1155, %v1156
          %v1158 = vsel %vm1074, %v1069, 0.0
          %v1159 = vadd.f32 %v1157, %v1158
          %v1160 = vrot.slane %v1159, 4
          %v1161 = vadd.f32 %v1159, %v1160
          %v1162 = vrot.slane %v1161, 2
          %v1163 = vadd.f32 %v1161, %v1162
          %v1164 = vrot.slane %v1163, 1
          %v1165 = vadd.f32 %v1163, %v1164
          %v1166 = vsel %vm1074, %v1070, 0.0
          %v1167 = vsel %vm1074, %v1071, 0.0
          %v1168 = vadd.f32 %v1166, %v1167
          %v1169 = vsel %vm1074, %v1072, 0.0
          %v1170 = vadd.f32 %v1168, %v1169
          %v1171 = vsel %vm1074, %v1073, 0.0
          %v1172 = vadd.f32 %v1170, %v1171
          %v1173 = vrot.slane %v1172, 4
          %v1174 = vadd.f32 %v1172, %v1173
          %v1175 = vrot.slane %v1174, 2
          %v1176 = vadd.f32 %v1174, %v1175
          %v1177 = vrot.slane %v1176, 1
          %v1178 = vadd.f32 %v1176, %v1177
          %vm1187 = vcmask 1041409
          %v1188 = vsel %vm1187, %v1100, %v1087
          %vm1189 = vcmask 1042434
          %v1190 = vsel %vm1189, %v1113, %v1188
          %vm1191 = vcmask 1043459
          %v1192 = vsel %vm1191, %v1126, %v1190
          %vm1193 = vcmask 1044484
          %v1194 = vsel %vm1193, %v1139, %v1192
          %vm1195 = vcmask 1045509
          %v1196 = vsel %vm1195, %v1152, %v1194
          %vm1197 = vcmask 1046534
          %v1198 = vsel %vm1197, %v1165, %v1196
          %vm1199 = vcmask 1047559
          %v1200 = vsel %vm1199, %v1178, %v1198
          %v1202 = vadd.f32 %v1041, %v1200
          %1203 = vst.msk [vmem:[#allocation3] sm:$0xff] %vm1074, %v1202
        $region80: #{tpu_custom_call.1} parent=55 // pred_fallthru
          _
        %p1204 = scmp.ge.s32.totalorder %s39, %s584
        %p1205 = scmp.lt.s32.totalorder %s39, %s585
        %p1206 = pnand %p1204, %p1205
        %p1207 = pneg %p1206
        // Predicated region
        $region81: #{tpu_custom_call.1} parent=55 // pred_check
          _
        $region82: #{tpu_custom_call.1} parent=55 // pred_check_branch
          %1209 = sbr.rel (%p1206) target = $region84
        $region83: #{tpu_custom_call.1} parent=55 // pred_region
          %s1210 = smul.u32 %s39, 32
          %v1211 = vlaneseq
          %v1212 = vshrl.u32 %v1211, 7
          %v1213 = vadd.s32 %v1212, 8
          %v1214 = vadd.s32 %v1212, 16
          %v1215 = vadd.s32 %v1212, 24
          %v1216 = vstv %s1210
          %v1217 = vadd.s32 %v1216, %v1212
          %v1218 = vadd.s32 %v1216, %v1213
          %v1219 = vadd.s32 %v1216, %v1214
          %v1220 = vadd.s32 %v1216, %v1215
          %v1221 = vld [vmem:[%s562] sm:$0xff]
          %v1222 = vcombine.high %v1221, %v1221
          %v1224 = vunpack.c.l.s4 1966171168
          %v1225 = vunpack.c.0.s8 %v1224
          %v1226 = vlaneseq
          %v1227 = vshrl.u32 %v1226, 7
          %v1228 = vsub.s32 %v1225, %v1227
          %v1229 = vrot.slane %v1221, %v1228
          %v1231 = vunpack.c.l.s4 1966171168
          %v1232 = vunpack.c.0.s8 %v1231
          %v1233 = vlaneseq
          %v1234 = vshrl.u32 %v1233, 7
          %v1235 = vsub.s32 %v1232, %v1234
          %v1236 = vrot.slane %v1222, %v1235
          %v1237 = vcombine.high %v1229, %v1229
          %v1238 = vcombine.high %v1236, %v1236
          %v1240 = vunpack.c.l.s4 1966171168
          %v1241 = vunpack.c.0.s8 %v1240
          %v1242 = vlaneseq
          %v1243 = vshrl.u32 %v1242, 7
          %v1244 = vsub.s32 %v1241, %v1243
          %v1245 = vrot.slane %v1229, %v1244
          %v1247 = vunpack.c.l.s4 1966171168
          %v1248 = vunpack.c.0.s8 %v1247
          %v1249 = vlaneseq
          %v1250 = vshrl.u32 %v1249, 7
          %v1251 = vsub.s32 %v1248, %v1250
          %v1252 = vrot.slane %v1236, %v1251
          %v1254 = vunpack.c.l.s4 1966171168
          %v1255 = vunpack.c.0.s8 %v1254
          %v1256 = vlaneseq
          %v1257 = vshrl.u32 %v1256, 7
          %v1258 = vsub.s32 %v1255, %v1257
          %v1259 = vrot.slane %v1237, %v1258
          %v1261 = vunpack.c.l.s4 1966171168
          %v1262 = vunpack.c.0.s8 %v1261
          %v1263 = vlaneseq
          %v1264 = vshrl.u32 %v1263, 7
          %v1265 = vsub.s32 %v1262, %v1264
          %v1266 = vrot.slane %v1238, %v1265
          %v1267 = vcombine.high %v1245, %v1245
          %v1268 = vcombine.high %v1252, %v1252
          %v1269 = vcombine.high %v1259, %v1259
          %v1270 = vcombine.high %v1266, %v1266
          %v1271 = vlaneseq
          %v1272 = vshrl.u32 %v1271, 7
          %v1273 = vsub.s32 0, %v1272
          %v1274 = vrot.slane %v1245, %v1273
          %v1275 = vlaneseq
          %v1276 = vshrl.u32 %v1275, 7
          %v1277 = vsub.s32 0, %v1276
          %v1278 = vrot.slane %v1259, %v1277
          %v1279 = vlaneseq
          %v1280 = vshrl.u32 %v1279, 7
          %v1281 = vsub.s32 0, %v1280
          %v1282 = vrot.slane %v1267, %v1281
          %v1283 = vlaneseq
          %v1284 = vshrl.u32 %v1283, 7
          %v1285 = vsub.s32 0, %v1284
          %v1286 = vrot.slane %v1269, %v1285
          %v1287 = vlaneseq
          %v1288 = vshrl.u32 %v1287, 7
          %v1289 = vsub.s32 0, %v1288
          %v1290 = vrot.slane %v1252, %v1289
          %v1291 = vlaneseq
          %v1292 = vshrl.u32 %v1291, 7
          %v1293 = vsub.s32 0, %v1292
          %v1294 = vrot.slane %v1266, %v1293
          %v1295 = vlaneseq
          %v1296 = vshrl.u32 %v1295, 7
          %v1297 = vsub.s32 0, %v1296
          %v1298 = vrot.slane %v1268, %v1297
          %v1299 = vlaneseq
          %v1300 = vshrl.u32 %v1299, 7
          %v1301 = vsub.s32 0, %v1300
          %v1302 = vrot.slane %v1270, %v1301
          %1303 = vset.pattern.permute.xlu0 0
          %1304 = vperm.xlu0 %1303, %v1274
          %v1305 = vpop.permute.xlu0 %1304
          %1306 = vset.pattern.permute.xlu0 0
          %1307 = vperm.xlu0 %1306, %v1278
          %v1308 = vpop.permute.xlu0 %1307
          %1309 = vset.pattern.permute.xlu0 0
          %1310 = vperm.xlu0 %1309, %v1282
          %v1311 = vpop.permute.xlu0 %1310
          %1312 = vset.pattern.permute.xlu0 0
          %1313 = vperm.xlu0 %1312, %v1286
          %v1314 = vpop.permute.xlu0 %1313
          %1315 = vset.pattern.permute.xlu0 0
          %1316 = vperm.xlu0 %1315, %v1290
          %v1317 = vpop.permute.xlu0 %1316
          %1318 = vset.pattern.permute.xlu0 0
          %1319 = vperm.xlu0 %1318, %v1294
          %v1320 = vpop.permute.xlu0 %1319
          %1321 = vset.pattern.permute.xlu0 0
          %1322 = vperm.xlu0 %1321, %v1298
          %v1323 = vpop.permute.xlu0 %1322
          %1324 = vset.pattern.permute.xlu0 0
          %1325 = vperm.xlu0 %1324, %v1302
          %v1326 = vpop.permute.xlu0 %1325
          %vm1327 = vcmp.lt.s32.totalorder %v1217, %v1305
          %vm1328 = vcmp.lt.s32.totalorder %v1218, %v1305
          %vm1329 = vcmp.lt.s32.totalorder %v1219, %v1305
          %vm1330 = vcmp.lt.s32.totalorder %v1220, %v1305
          %vm1331 = vcmp.lt.s32.totalorder %v1217, %v1308
          %vm1332 = vcmp.lt.s32.totalorder %v1218, %v1308
          %vm1333 = vcmp.lt.s32.totalorder %v1219, %v1308
          %vm1334 = vcmp.lt.s32.totalorder %v1220, %v1308
          %vm1335 = vcmp.lt.s32.totalorder %v1217, %v1311
          %vm1336 = vcmp.lt.s32.totalorder %v1218, %v1311
          %vm1337 = vcmp.lt.s32.totalorder %v1219, %v1311
          %vm1338 = vcmp.lt.s32.totalorder %v1220, %v1311
          %vm1339 = vcmp.lt.s32.totalorder %v1217, %v1314
          %vm1340 = vcmp.lt.s32.totalorder %v1218, %v1314
          %vm1341 = vcmp.lt.s32.totalorder %v1219, %v1314
          %vm1342 = vcmp.lt.s32.totalorder %v1220, %v1314
          %vm1343 = vcmp.lt.s32.totalorder %v1217, %v1317
          %vm1344 = vcmp.lt.s32.totalorder %v1218, %v1317
          %vm1345 = vcmp.lt.s32.totalorder %v1219, %v1317
          %vm1346 = vcmp.lt.s32.totalorder %v1220, %v1317
          %vm1347 = vcmp.lt.s32.totalorder %v1217, %v1320
          %vm1348 = vcmp.lt.s32.totalorder %v1218, %v1320
          %vm1349 = vcmp.lt.s32.totalorder %v1219, %v1320
          %vm1350 = vcmp.lt.s32.totalorder %v1220, %v1320
          %vm1351 = vcmp.lt.s32.totalorder %v1217, %v1323
          %vm1352 = vcmp.lt.s32.totalorder %v1218, %v1323
          %vm1353 = vcmp.lt.s32.totalorder %v1219, %v1323
          %vm1354 = vcmp.lt.s32.totalorder %v1220, %v1323
          %vm1355 = vcmp.lt.s32.totalorder %v1217, %v1326
          %vm1356 = vcmp.lt.s32.totalorder %v1218, %v1326
          %vm1357 = vcmp.lt.s32.totalorder %v1219, %v1326
          %vm1358 = vcmp.lt.s32.totalorder %v1220, %v1326
          %v1359 = vld [vmem:[#allocation3] sm:$0xff]
          %v1360 = vld [vmem:[%s488] sm:$0xff]
          %v1361 = vld [vmem:[%s488 + $0x8] sm:$0xff]
          %v1362 = vld [vmem:[%s488 + $0x10] sm:$0xff]
          %v1363 = vld [vmem:[%s488 + $0x18] sm:$0xff]
          %v1364 = vld [vmem:[%s488 + $0x20] sm:$0xff]
          %v1365 = vld [vmem:[%s488 + $0x28] sm:$0xff]
          %v1366 = vld [vmem:[%s488 + $0x30] sm:$0xff]
          %v1367 = vld [vmem:[%s488 + $0x38] sm:$0xff]
          %v1368 = vld [vmem:[%s488 + $0x40] sm:$0xff]
          %v1369 = vld [vmem:[%s488 + $0x48] sm:$0xff]
          %v1370 = vld [vmem:[%s488 + $0x50] sm:$0xff]
          %v1371 = vld [vmem:[%s488 + $0x58] sm:$0xff]
          %v1372 = vld [vmem:[%s488 + $0x60] sm:$0xff]
          %v1373 = vld [vmem:[%s488 + $0x68] sm:$0xff]
          %v1374 = vld [vmem:[%s488 + $0x70] sm:$0xff]
          %v1375 = vld [vmem:[%s488 + $0x78] sm:$0xff]
          %v1376 = vld [vmem:[%s488 + $0x80] sm:$0xff]
          %v1377 = vld [vmem:[%s488 + $0x88] sm:$0xff]
          %v1378 = vld [vmem:[%s488 + $0x90] sm:$0xff]
          %v1379 = vld [vmem:[%s488 + $0x98] sm:$0xff]
          %v1380 = vld [vmem:[%s488 + $0xa0] sm:$0xff]
          %v1381 = vld [vmem:[%s488 + $0xa8] sm:$0xff]
          %v1382 = vld [vmem:[%s488 + $0xb0] sm:$0xff]
          %v1383 = vld [vmem:[%s488 + $0xb8] sm:$0xff]
          %v1384 = vld [vmem:[%s488 + $0xc0] sm:$0xff]
          %v1385 = vld [vmem:[%s488 + $0xc8] sm:$0xff]
          %v1386 = vld [vmem:[%s488 + $0xd0] sm:$0xff]
          %v1387 = vld [vmem:[%s488 + $0xd8] sm:$0xff]
          %v1388 = vld [vmem:[%s488 + $0xe0] sm:$0xff]
          %v1389 = vld [vmem:[%s488 + $0xe8] sm:$0xff]
          %v1390 = vld [vmem:[%s488 + $0xf0] sm:$0xff]
          %v1391 = vld [vmem:[%s488 + $0xf8] sm:$0xff]
          %v1392 = vsel %vm1327, %v1360, 0.0
          %v1393 = vsel %vm1328, %v1361, 0.0
          %v1394 = vsel %vm1329, %v1362, 0.0
          %v1395 = vsel %vm1330, %v1363, 0.0
          %v1396 = vsel %vm1331, %v1364, 0.0
          %v1397 = vsel %vm1332, %v1365, 0.0
          %v1398 = vsel %vm1333, %v1366, 0.0
          %v1399 = vsel %vm1334, %v1367, 0.0
          %v1400 = vsel %vm1335, %v1368, 0.0
          %v1401 = vsel %vm1336, %v1369, 0.0
          %v1402 = vsel %vm1337, %v1370, 0.0
          %v1403 = vsel %vm1338, %v1371, 0.0
          %v1404 = vsel %vm1339, %v1372, 0.0
          %v1405 = vsel %vm1340, %v1373, 0.0
          %v1406 = vsel %vm1341, %v1374, 0.0
          %v1407 = vsel %vm1342, %v1375, 0.0
          %v1408 = vsel %vm1343, %v1376, 0.0
          %v1409 = vsel %vm1344, %v1377, 0.0
          %v1410 = vsel %vm1345, %v1378, 0.0
          %v1411 = vsel %vm1346, %v1379, 0.0
          %v1412 = vsel %vm1347, %v1380, 0.0
          %v1413 = vsel %vm1348, %v1381, 0.0
          %v1414 = vsel %vm1349, %v1382, 0.0
          %v1415 = vsel %vm1350, %v1383, 0.0
          %v1416 = vsel %vm1351, %v1384, 0.0
          %v1417 = vsel %vm1352, %v1385, 0.0
          %v1418 = vsel %vm1353, %v1386, 0.0
          %v1419 = vsel %vm1354, %v1387, 0.0
          %v1420 = vsel %vm1355, %v1388, 0.0
          %v1421 = vsel %vm1356, %v1389, 0.0
          %v1422 = vsel %vm1357, %v1390, 0.0
          %v1423 = vsel %vm1358, %v1391, 0.0
          %vm1424 = vcmask 523264
          %v1425 = vsel %vm1424, %v1392, 0.0
          %v1426 = vsel %vm1424, %v1393, 0.0
          %v1427 = vadd.f32 %v1425, %v1426
          %v1428 = vsel %vm1424, %v1394, 0.0
          %v1429 = vadd.f32 %v1427, %v1428
          %v1430 = vsel %vm1424, %v1395, 0.0
          %v1431 = vadd.f32 %v1429, %v1430
          %v1432 = vrot.slane %v1431, 4
          %v1433 = vadd.f32 %v1431, %v1432
          %v1434 = vrot.slane %v1433, 2
          %v1435 = vadd.f32 %v1433, %v1434
          %v1436 = vrot.slane %v1435, 1
          %v1437 = vadd.f32 %v1435, %v1436
          %v1438 = vsel %vm1424, %v1396, 0.0
          %v1439 = vsel %vm1424, %v1397, 0.0
          %v1440 = vadd.f32 %v1438, %v1439
          %v1441 = vsel %vm1424, %v1398, 0.0
          %v1442 = vadd.f32 %v1440, %v1441
          %v1443 = vsel %vm1424, %v1399, 0.0
          %v1444 = vadd.f32 %v1442, %v1443
          %v1445 = vrot.slane %v1444, 4
          %v1446 = vadd.f32 %v1444, %v1445
          %v1447 = vrot.slane %v1446, 2
          %v1448 = vadd.f32 %v1446, %v1447
          %v1449 = vrot.slane %v1448, 1
          %v1450 = vadd.f32 %v1448, %v1449
          %v1451 = vsel %vm1424, %v1400, 0.0
          %v1452 = vsel %vm1424, %v1401, 0.0
          %v1453 = vadd.f32 %v1451, %v1452
          %v1454 = vsel %vm1424, %v1402, 0.0
          %v1455 = vadd.f32 %v1453, %v1454
          %v1456 = vsel %vm1424, %v1403, 0.0
          %v1457 = vadd.f32 %v1455, %v1456
          %v1458 = vrot.slane %v1457, 4
          %v1459 = vadd.f32 %v1457, %v1458
          %v1460 = vrot.slane %v1459, 2
          %v1461 = vadd.f32 %v1459, %v1460
          %v1462 = vrot.slane %v1461, 1
          %v1463 = vadd.f32 %v1461, %v1462
          %v1464 = vsel %vm1424, %v1404, 0.0
          %v1465 = vsel %vm1424, %v1405, 0.0
          %v1466 = vadd.f32 %v1464, %v1465
          %v1467 = vsel %vm1424, %v1406, 0.0
          %v1468 = vadd.f32 %v1466, %v1467
          %v1469 = vsel %vm1424, %v1407, 0.0
          %v1470 = vadd.f32 %v1468, %v1469
          %v1471 = vrot.slane %v1470, 4
          %v1472 = vadd.f32 %v1470, %v1471
          %v1473 = vrot.slane %v1472, 2
          %v1474 = vadd.f32 %v1472, %v1473
          %v1475 = vrot.slane %v1474, 1
          %v1476 = vadd.f32 %v1474, %v1475
          %v1477 = vsel %vm1424, %v1408, 0.0
          %v1478 = vsel %vm1424, %v1409, 0.0
          %v1479 = vadd.f32 %v1477, %v1478
          %v1480 = vsel %vm1424, %v1410, 0.0
          %v1481 = vadd.f32 %v1479, %v1480
          %v1482 = vsel %vm1424, %v1411, 0.0
          %v1483 = vadd.f32 %v1481, %v1482
          %v1484 = vrot.slane %v1483, 4
          %v1485 = vadd.f32 %v1483, %v1484
          %v1486 = vrot.slane %v1485, 2
          %v1487 = vadd.f32 %v1485, %v1486
          %v1488 = vrot.slane %v1487, 1
          %v1489 = vadd.f32 %v1487, %v1488
          %v1490 = vsel %vm1424, %v1412, 0.0
          %v1491 = vsel %vm1424, %v1413, 0.0
          %v1492 = vadd.f32 %v1490, %v1491
          %v1493 = vsel %vm1424, %v1414, 0.0
          %v1494 = vadd.f32 %v1492, %v1493
          %v1495 = vsel %vm1424, %v1415, 0.0
          %v1496 = vadd.f32 %v1494, %v1495
          %v1497 = vrot.slane %v1496, 4
          %v1498 = vadd.f32 %v1496, %v1497
          %v1499 = vrot.slane %v1498, 2
          %v1500 = vadd.f32 %v1498, %v1499
          %v1501 = vrot.slane %v1500, 1
          %v1502 = vadd.f32 %v1500, %v1501
          %v1503 = vsel %vm1424, %v1416, 0.0
          %v1504 = vsel %vm1424, %v1417, 0.0
          %v1505 = vadd.f32 %v1503, %v1504
          %v1506 = vsel %vm1424, %v1418, 0.0
          %v1507 = vadd.f32 %v1505, %v1506
          %v1508 = vsel %vm1424, %v1419, 0.0
          %v1509 = vadd.f32 %v1507, %v1508
          %v1510 = vrot.slane %v1509, 4
          %v1511 = vadd.f32 %v1509, %v1510
          %v1512 = vrot.slane %v1511, 2
          %v1513 = vadd.f32 %v1511, %v1512
          %v1514 = vrot.slane %v1513, 1
          %v1515 = vadd.f32 %v1513, %v1514
          %v1516 = vsel %vm1424, %v1420, 0.0
          %v1517 = vsel %vm1424, %v1421, 0.0
          %v1518 = vadd.f32 %v1516, %v1517
          %v1519 = vsel %vm1424, %v1422, 0.0
          %v1520 = vadd.f32 %v1518, %v1519
          %v1521 = vsel %vm1424, %v1423, 0.0
          %v1522 = vadd.f32 %v1520, %v1521
          %v1523 = vrot.slane %v1522, 4
          %v1524 = vadd.f32 %v1522, %v1523
          %v1525 = vrot.slane %v1524, 2
          %v1526 = vadd.f32 %v1524, %v1525
          %v1527 = vrot.slane %v1526, 1
          %v1528 = vadd.f32 %v1526, %v1527
          %vm1537 = vcmask 1041409
          %v1538 = vsel %vm1537, %v1450, %v1437
          %vm1539 = vcmask 1042434
          %v1540 = vsel %vm1539, %v1463, %v1538
          %vm1541 = vcmask 1043459
          %v1542 = vsel %vm1541, %v1476, %v1540
          %vm1543 = vcmask 1044484
          %v1544 = vsel %vm1543, %v1489, %v1542
          %vm1545 = vcmask 1045509
          %v1546 = vsel %vm1545, %v1502, %v1544
          %vm1547 = vcmask 1046534
          %v1548 = vsel %vm1547, %v1515, %v1546
          %vm1549 = vcmask 1047559
          %v1550 = vsel %vm1549, %v1528, %v1548
          %v1552 = vadd.f32 %v1359, %v1550
          %1553 = vst.msk [vmem:[#allocation3] sm:$0xff] %vm1424, %v1552
        $region84: #{tpu_custom_call.1} parent=55 // pred_fallthru
          _
        %p1554 = scmp.eq.s32.totalorder %s39, 3
        // Predicated region
        $region85: #{tpu_custom_call.1} parent=55 // pred_check
          %p1555 = pneg %p1554
        $region86: #{tpu_custom_call.1} parent=55 // pred_check_branch
          %1557 = sbr.rel (%p1555) target = $region88
        $region87: #{tpu_custom_call.1} parent=55 // pred_region
          %v1558 = vld [vmem:[#allocation2] sm:$0xff]
          %v1559 = vld [vmem:[%s566] sm:$0xff]
          %1561 = vset.pattern.permute.xlu0 0
          %1562 = vperm.xlu0 %1561, %v1559
          %v1563 = vpop.permute.xlu0 %1562
          %v1565 = vmul.f32 %v1558, %v1563
          %v1566 = vld [vmem:[#allocation3] sm:$0xff]
          %v1567 = vld [vmem:[%s570] sm:$0xff]
          %1569 = vset.pattern.permute.xlu0 0
          %1570 = vperm.xlu0 %1569, %v1567
          %v1571 = vpop.permute.xlu0 %1570
          %v1573 = vmul.f32 %v1566, %v1571
          %1574 = vadd.xlane.f32.xlu0 %v1565
          %v1575 = vpop.xlane.xlu0 %1574
          %vm1576 = vcmask 523264
          %v1577 = vsel %vm1576, %v1573, 0.0
          %1578 = vadd.xlane.f32.xlu0 %v1577
          %v1579 = vpop.xlane.xlu0 %1578
          %v1580 = vadd.f32 %v1575, %v1579
          %v1581 = vmul.f32 %v1580, 0.0052083335
          %v1582 = vsub.f32 %v1565, %v1581
          %v1583 = vsub.f32 %v1573, %v1581
          %v1584 = vmul.f32 %v1582, %v1582
          %1585 = vadd.xlane.f32.xlu0 %v1584
          %v1586 = vpop.xlane.xlu0 %1585
          %v1587 = vmul.f32 %v1583, %v1583
          %v1588 = vsel %vm1576, %v1587, 0.0
          %1589 = vadd.xlane.f32.xlu0 %v1588
          %v1590 = vpop.xlane.xlu0 %1589
          %v1591 = vadd.f32 %v1586, %v1590
          %v1592 = vmul.f32 %v1591, 0.0052083335
          %v1593 = vadd.f32 %v1592, 1e-05
          %v1594 = vrsqrt.pop %v1593
          %v1595 = vmul.f32 %v1582, %v1594
          %v1596 = vld [vmem:[%s10] sm:$0xff]
          %v1597 = vld [vmem:[%s10 + $0x8] sm:$0xff]
          %v1598 = vld [vmem:[%s10 + $0x10] sm:$0xff]
          %v1599 = vld [vmem:[%s10 + $0x18] sm:$0xff]
          %v1600 = vld [vmem:[%s10 + $0x20] sm:$0xff]
          %v1601 = vld [vmem:[%s10 + $0x28] sm:$0xff]
          %v1602 = vld [vmem:[%s10 + $0x30] sm:$0xff]
          %v1603 = vld [vmem:[%s10 + $0x38] sm:$0xff]
          %v1604 = vld [vmem:[%s10 + $0x40] sm:$0xff]
          %v1605 = vld [vmem:[%s10 + $0x48] sm:$0xff]
          %v1606 = vld [vmem:[%s10 + $0x50] sm:$0xff]
          %v1607 = vld [vmem:[%s10 + $0x58] sm:$0xff]
          %v1608 = vld [vmem:[%s10 + $0x60] sm:$0xff]
          %v1609 = vld [vmem:[%s10 + $0x68] sm:$0xff]
          %v1610 = vld [vmem:[%s10 + $0x70] sm:$0xff]
          %v1611 = vld [vmem:[%s10 + $0x78] sm:$0xff]
          %v1612 = vmul.f32 %v1583, %v1594
          %v1613 = vld [vmem:[%s11] sm:$0xff]
          %v1614 = vld [vmem:[%s11 + $0x8] sm:$0xff]
          %v1615 = vld [vmem:[%s11 + $0x10] sm:$0xff]
          %v1616 = vld [vmem:[%s11 + $0x18] sm:$0xff]
          %v1617 = vld [vmem:[%s11 + $0x20] sm:$0xff]
          %v1618 = vld [vmem:[%s11 + $0x28] sm:$0xff]
          %v1619 = vld [vmem:[%s11 + $0x30] sm:$0xff]
          %v1620 = vld [vmem:[%s11 + $0x38] sm:$0xff]
          %v1622 = vsel %vm1576, %v1612, 0
          %1624 = vmatprep.subr.mxu0 0.0
          %1625 = vmatpush1.msra.mxu0 %v1613
          %1626 = vmatprep.subr.mxu0 0.0
          %1627 = vmatpush1.msra.mxu0 %v1614
          %1628 = vmatprep.subr.mxu0 0.0
          %1629 = vmatpush1.msra.mxu0 %v1615
          %1630 = vmatprep.subr.mxu0 0.0
          %1631 = vmatpush1.msra.mxu0 %v1616
          %1632 = vmatprep.subr.mxu0 0.0
          %1633 = vmatpush1.msra.mxu0 %v1617
          %1634 = vmatprep.subr.mxu0 0.0
          %1635 = vmatpush1.msra.mxu0 %v1618
          %1636 = vmatprep.subr.mxu0 0.0
          %1637 = vmatpush1.msra.mxu0 %v1619
          %1638 = vmatprep.subr.mxu0 0.0
          %1639 = vmatpush1.msra.mxu0 %v1620
          %1640 = vmatprep.subr.mxu0 0.0
          %1641 = vmatpush1.msra.mxu0 0.0
          %1642 = vmatprep.subr.mxu0 0.0
          %1643 = vmatpush1.msra.mxu0 0.0
          %1644 = vmatprep.subr.mxu0 0.0
          %1645 = vmatpush1.msra.mxu0 0.0
          %1646 = vmatprep.subr.mxu0 0.0
          %1647 = vmatpush1.msra.mxu0 0.0
          %1648 = vmatprep.subr.mxu0 0.0
          %1649 = vmatpush1.msra.mxu0 0.0
          %1650 = vmatprep.subr.mxu0 0.0
          %1651 = vmatpush1.msra.mxu0 0.0
          %1652 = vmatprep.subr.mxu0 0.0
          %1653 = vmatpush1.msra.mxu0 0.0
          %1654 = vmatprep.subr.mxu0 0.0
          %1655 = vmatpush1.msra.mxu0 0.0
          %1656 = vmatprep.subr.mxu0 0.0
          %1657 = vmatpush1.msra.mxu0 0.0
          %1658 = vmatprep.subr.mxu0 0.0
          %1659 = vmatpush1.msra.mxu0 0.0
          %1660 = vmatprep.subr.mxu0 0.0
          %1661 = vmatpush1.msra.mxu0 0.0
          %1662 = vmatprep.subr.mxu0 0.0
          %1663 = vmatpush1.msra.mxu0 0.0
          %1664 = vmatprep.subr.mxu0 0.0
          %1665 = vmatpush1.msra.mxu0 0.0
          %1666 = vmatprep.subr.mxu0 0.0
          %1667 = vmatpush1.msra.mxu0 0.0
          %1668 = vmatprep.subr.mxu0 0.0
          %1669 = vmatpush1.msra.mxu0 0.0
          %1670 = vmatprep.subr.mxu0 0.0
          %1671 = vmatpush1.msra.mxu0 0.0
          %1672 = vmatprep.subr.mxu0 0.0
          %1673 = vmatpush1.msra.mxu0 0.0
          %1674 = vmatprep.subr.mxu0 0.0
          %1675 = vmatpush1.msra.mxu0 0.0
          %1676 = vmatprep.subr.mxu0 0.0
          %1677 = vmatpush1.msra.mxu0 0.0
          %1678 = vmatprep.subr.mxu0 0.0
          %1679 = vmatpush1.msra.mxu0 0.0
          %1680 = vmatprep.subr.mxu0 0.0
          %1681 = vmatpush1.msra.mxu0 0.0
          %1682 = vmatprep.subr.mxu0 0.0
          %1683 = vmatpush1.msra.mxu0 0.0
          %1684 = vmatprep.subr.mxu0 0.0
          %1685 = vmatpush1.msra.mxu0 0.0
          %1686 = vmatprep.subr.mxu0 0.0
          %1687 = vmatpush1.msra.mxu0 0.0
          %1688 = vmatprep.mubr.f32.mxu0 0.0
          %1689 = vmatmul.mubr.f32.gmra.mrb[0].mxu0 %v1622
          %v1690 = vpop.f32.mrb[0].mxu0
          %v1691 = vadd.f32 0.0, %v1690
          %v1692 = vpop.f32.mrb[0].mxu0
          %1693 = vdwg.mxu0
          %1694 = vmatprep.subr.mxu0 0.0
          %1695 = vmatpush1.msra.mxu0 %v1596
          %1696 = vmatprep.subr.mxu0 0.0
          %1697 = vmatpush1.msra.mxu0 %v1597
          %1698 = vmatprep.subr.mxu0 0.0
          %1699 = vmatpush1.msra.mxu0 %v1598
          %1700 = vmatprep.subr.mxu0 0.0
          %1701 = vmatpush1.msra.mxu0 %v1599
          %1702 = vmatprep.subr.mxu0 0.0
          %1703 = vmatpush1.msra.mxu0 %v1600
          %1704 = vmatprep.subr.mxu0 0.0
          %1705 = vmatpush1.msra.mxu0 %v1601
          %1706 = vmatprep.subr.mxu0 0.0
          %1707 = vmatpush1.msra.mxu0 %v1602
          %1708 = vmatprep.subr.mxu0 0.0
          %1709 = vmatpush1.msra.mxu0 %v1603
          %1710 = vmatprep.subr.mxu0 0.0
          %1711 = vmatpush1.msra.mxu0 %v1604
          %1712 = vmatprep.subr.mxu0 0.0
          %1713 = vmatpush1.msra.mxu0 %v1605
          %1714 = vmatprep.subr.mxu0 0.0
          %1715 = vmatpush1.msra.mxu0 %v1606
          %1716 = vmatprep.subr.mxu0 0.0
          %1717 = vmatpush1.msra.mxu0 %v1607
          %1718 = vmatprep.subr.mxu0 0.0
          %1719 = vmatpush1.msra.mxu0 %v1608
          %1720 = vmatprep.subr.mxu0 0.0
          %1721 = vmatpush1.msra.mxu0 %v1609
          %1722 = vmatprep.subr.mxu0 0.0
          %1723 = vmatpush1.msra.mxu0 %v1610
          %1724 = vmatprep.subr.mxu0 0.0
          %1725 = vmatpush1.msra.mxu0 %v1611
          %1726 = vmatprep.subr.mxu0 0.0
          %1727 = vmatpush1.msra.mxu0 0.0
          %1728 = vmatprep.subr.mxu0 0.0
          %1729 = vmatpush1.msra.mxu0 0.0
          %1730 = vmatprep.subr.mxu0 0.0
          %1731 = vmatpush1.msra.mxu0 0.0
          %1732 = vmatprep.subr.mxu0 0.0
          %1733 = vmatpush1.msra.mxu0 0.0
          %1734 = vmatprep.subr.mxu0 0.0
          %1735 = vmatpush1.msra.mxu0 0.0
          %1736 = vmatprep.subr.mxu0 0.0
          %1737 = vmatpush1.msra.mxu0 0.0
          %1738 = vmatprep.subr.mxu0 0.0
          %1739 = vmatpush1.msra.mxu0 0.0
          %1740 = vmatprep.subr.mxu0 0.0
          %1741 = vmatpush1.msra.mxu0 0.0
          %1742 = vmatprep.subr.mxu0 0.0
          %1743 = vmatpush1.msra.mxu0 0.0
          %1744 = vmatprep.subr.mxu0 0.0
          %1745 = vmatpush1.msra.mxu0 0.0
          %1746 = vmatprep.subr.mxu0 0.0
          %1747 = vmatpush1.msra.mxu0 0.0
          %1748 = vmatprep.subr.mxu0 0.0
          %1749 = vmatpush1.msra.mxu0 0.0
          %1750 = vmatprep.subr.mxu0 0.0
          %1751 = vmatpush1.msra.mxu0 0.0
          %1752 = vmatprep.subr.mxu0 0.0
          %1753 = vmatpush1.msra.mxu0 0.0
          %1754 = vmatprep.subr.mxu0 0.0
          %1755 = vmatpush1.msra.mxu0 0.0
          %1756 = vmatprep.subr.mxu0 0.0
          %1757 = vmatpush1.msra.mxu0 0.0
          %1758 = vmatprep.mubr.f32.mxu0 0.0
          %1759 = vmatmul.mubr.f32.gmra.mrb[0].mxu0 %v1595
          %v1760 = vpop.f32.mrb[0].mxu0
          %v1761 = vadd.f32 %v1691, %v1760
          %v1762 = vpop.f32.mrb[0].mxu0
          %1763 = vdwg.mxu0
          %v1764 = vld [vmem:[%s12] sm:$0x1]
          %v1766 = vlaneseq
          %v1767 = vshrl.u32 %v1766, 7
          %v1768 = vsub.s32 0, %v1767
          %v1769 = vrot.slane %v1764, %v1768
          %v1771 = vadd.f32 %v1761, %v1769
          %vm1772 = vcmask 31744
          %1773 = vst.msk [vmem:[%s574] sm:$0xff] %vm1772, %v1771
        $region88: #{tpu_custom_call.1} parent=55 // pred_fallthru
          _
        %p1774 = scmp.lt.s32.totalorder %s38, 0
        %s1775 = scalar_select %p1774, %s38, 0
        %s1776 = smul.addr %s1775, 8
        %s1777 = scalar_lea.vmem %s13, %s1776
        // Predicated region
        $region89: #{tpu_custom_call.1} parent=55 // pred_check
          %p1778 = pneg %p303
        $region90: #{tpu_custom_call.1} parent=55 // pred_check_branch
          %1780 = sbr.rel (%p1778) target = $region92
        $region91: #{tpu_custom_call.1} parent=55 // pred_region
          _
        $region92: #{tpu_custom_call.1} parent=55 // pred_fallthru
          _
        // Predicated region
        $region93: #{tpu_custom_call.1} parent=55 // pred_check
          %p1781 = pneg %p303
        $region94: #{tpu_custom_call.1} parent=55 // pred_check_branch
          %1783 = sbr.rel (%p1781) target = $region96
        $region95: #{tpu_custom_call.1} parent=55 // pred_region
          %p1784 = scmp.lt.s32.totalorder %s38, 0
          %s1785 = scalar_select %p1784, %s38, 0
          %s1786 = smul.addr %s1785, 8
          %s1787 = scalar_lea.vmem %s13, %s1786
        $region96: #{tpu_custom_call.1} parent=55 // pred_fallthru
          _
      $region56: #{tpu_custom_call.1} parent=5 // pred_fallthru
        _
      %p1788 = scmp.le.s32.totalorder 2, %s29
      // Predicated region
      $region97: #{tpu_custom_call.1} parent=5 // pred_check
        %p1789 = pneg %p1788
      $region98: #{tpu_custom_call.1} parent=5 // pred_check_branch
        %1791 = sbr.rel (%p1789) target = $region100
      $region99: #{tpu_custom_call.1} parent=5 // pred_region
        %s1792 = ssub.s32 %s29, 2
      $region100: #{tpu_custom_call.1} parent=5 // pred_fallthru
        _
    $region6: #{tpu_custom_call.1} parent=1 // loop_footer
      %s33 = sadd.s32 1, %s29
    $region7: #{tpu_custom_call.1} parent=1 // loop_footer_branch
      %28 = sbr.rel target = $region3
    $region8: #{tpu_custom_call.1} parent=1 // loop_exit
      _
    %1793 = vsyncpa [#allocation10], 1
    %s1794 = scalar_lea.sflag [#allocation10], 1
    %1795 = vsyncpa %s1794, 1
    %1796 = vsyncpa [#allocation12], 1
    %s1797 = scalar_lea.sflag [#allocation12], 1
    %1798 = vsyncpa %s1797, 1

</llo_original>
